<compile_context>
chip_gen: v7x
topology: tpu7x:2x2x1
jax: 0.10.0
libtpu: 0.0.40
codegen_flags: <defaults>
</compile_context>

<pallas_src>
import functools

import jax
import jax.numpy as jnp
from jax.experimental import pallas as pl
from jax.experimental.pallas import tpu as pltpu

# Synthetic ATOM_FEATURES vocabulary sizes and per-feature embedding widths.
ATOM_FEATURE_SIZES = (10, 6, 5, 4)
ATOM_EMBED_SIZES = (8, 8, 8, 8)           # concatenated node dim D = 32
EDGE_VOCAB = 8
NODE_DIM = sum(ATOM_EMBED_SIZES)          # 32
HIDDEN = 32                               # GNN.out_channels -> Encoder.hidden_size


# ----------------------------------------------------------------------------
# Single fused kernel: atom embedding + edge embedding + one GNN message
# passing layer + global mean pool.
#
#   src_ref, dst_ref     : SMEM int32 [E]       (scalar-prefetched edge index)
#   atom_idx_ref         : VMEM int32 [N, F]    (codes already vocab-offset)
#   edge_idx_ref         : VMEM int32 [E, 1]
#   batch_ref            : VMEM int32 [1, N]
#   atom_tab_ref         : VMEM f32  [Vp, D]    (block-diagonal, Vp padded to 8x)
#   edge_tab_ref         : VMEM f32  [Ve, D]
#   w_msg / b_msg / w_self / b_out : GNN params
#   nodes_ref [N, H], graphs_ref [G, H] : outputs
#   x_scr [N,D], xs_scr [E,D], msg_scr [E,H], agg_scr [N,H] : VMEM scratch
# ----------------------------------------------------------------------------
def encoder_kernel(src_ref, dst_ref,
                   atom_idx_ref, edge_idx_ref, batch_ref,
                   atom_tab_ref, edge_tab_ref,
                   w_msg_ref, b_msg_ref, w_self_ref, b_out_ref,
                   nodes_ref, graphs_ref,
                   x_scr, xs_scr, msg_scr, agg_scr):
    N, F = atom_idx_ref.shape
    E = edge_idx_ref.shape[0]
    G = graphs_ref.shape[0]
    Vp = atom_tab_ref.shape[0]
    Ve = edge_tab_ref.shape[0]

    # --- atom embedding: multi-hot [N, Vp] @ block-diagonal table (== torch.cat
    #     of per-feature nn.Embedding lookups) ---
    idx = atom_idx_ref[...]                                        # [N, F]
    iota_nv = jax.lax.broadcasted_iota(jnp.int32, (N, Vp), 1)
    mh = jnp.zeros((N, Vp), jnp.float32)
    for f in range(F):                                             # F small & static
        mh = mh + (iota_nv == idx[:, f:f + 1]).astype(jnp.float32)
    x_scr[...] = jnp.dot(mh, atom_tab_ref[...],
                         preferred_element_type=jnp.float32)       # [N, D]

    # --- edge embedding: one-hot [E, Ve] @ table ---
    iota_ev = jax.lax.broadcasted_iota(jnp.int32, (E, Ve), 1)
    e_oh = (iota_ev == edge_idx_ref[...]).astype(jnp.float32)
    e_emb = jnp.dot(e_oh, edge_tab_ref[...],
                    preferred_element_type=jnp.float32)            # [E, D]

    # --- gather x[src]: O(E) scalar-indexed row copies (no [E,N] one-hot);
    #     iterations are independent -> unrolled so LLO can interleave them ---
    def gather_body(e, carry):
        s = src_ref[e]
        xs_scr[pl.ds(e, 1), :] = x_scr[pl.ds(s, 1), :]
        return carry
    jax.lax.fori_loop(0, E, gather_body, 0, unroll=True)           # E small/static

    # --- per-edge messages: one bulk [E,D]@[D,H] MXU matmul ---
    msg = jnp.dot(xs_scr[...] + e_emb, w_msg_ref[...],
                  preferred_element_type=jnp.float32) + b_msg_ref[...]
    msg_scr[...] = jnp.maximum(msg, 0.0)                           # [E, H]

    # --- scatter-add messages onto destination nodes: O(E) row adds ---
    agg_scr[...] = jnp.zeros_like(agg_scr)
    def scatter_body(e, carry):
        d = dst_ref[e]
        agg_scr[pl.ds(d, 1), :] = (agg_scr[pl.ds(d, 1), :]
                                   + msg_scr[pl.ds(e, 1), :])
        return carry
    jax.lax.fori_loop(0, E, scatter_body, 0, unroll=True)

    # --- node update ---
    nodes = jnp.maximum(
        jnp.dot(x_scr[...], w_self_ref[...],
                preferred_element_type=jnp.float32)
        + agg_scr[...] + b_out_ref[...], 0.0)                      # [N, H]
    nodes_ref[...] = nodes

    # --- global mean pool: PRE-TRANSPOSED [G, N] one-hot -> plain MXU matmul,
    #     divide via EUP reciprocal ---
    iota_gn = jax.lax.broadcasted_iota(jnp.int32, (G, N), 0)
    pool_oh = (iota_gn == batch_ref[...]).astype(jnp.float32)      # [G, N]
    sums = jnp.dot(pool_oh, nodes, preferred_element_type=jnp.float32)  # [G, H]
    counts = jnp.sum(pool_oh, axis=1, keepdims=True)               # [G, 1]
    graphs_ref[...] = sums * pl.reciprocal(jnp.maximum(counts, 1.0),
                                           approx=True)


# ----------------------------------------------------------------------------
# Parameter construction (deterministic, xavier_normal-like).
# ----------------------------------------------------------------------------
def init_params(key):
    keys = jax.random.split(key, len(ATOM_FEATURE_SIZES) + 3)
    v_total = sum(ATOM_FEATURE_SIZES)                  # 25
    v_pad = ((v_total + 7) // 8) * 8                   # 32: sublane-aligned K dim
    atom_table = jnp.zeros((v_pad, NODE_DIM), jnp.float32)
    offsets = []
    voff, doff = 0, 0
    for i, (v, d) in enumerate(zip(ATOM_FEATURE_SIZES, ATOM_EMBED_SIZES)):
        std = (2.0 / (v + d)) ** 0.5
        tbl = std * jax.random.normal(keys[i], (v, d), jnp.float32)
        atom_table = atom_table.at[voff:voff + v, doff:doff + d].set(tbl)
        offsets.append(voff)
        voff += v
        doff += d
    std_e = (2.0 / (EDGE_VOCAB + NODE_DIM)) ** 0.5
    edge_table = std_e * jax.random.normal(keys[-3], (EDGE_VOCAB, NODE_DIM),
                                           jnp.float32)
    std_w = (2.0 / (NODE_DIM + HIDDEN)) ** 0.5
    w_msg = std_w * jax.random.normal(keys[-2], (NODE_DIM, HIDDEN), jnp.float32)
    w_self = std_w * jax.random.normal(keys[-1], (NODE_DIM, HIDDEN), jnp.float32)
    return dict(
        atom_table=atom_table,
        atom_offsets=jnp.array(offsets, jnp.int32),
        edge_table=edge_table,
        w_msg=w_msg,
        b_msg=jnp.zeros((1, HIDDEN), jnp.float32),
        w_self=w_self,
        b_out=jnp.zeros((1, HIDDEN), jnp.float32),
    )


# ----------------------------------------------------------------------------
# Encoder.forward equivalent — single fused pallas_call.
# ----------------------------------------------------------------------------
@functools.partial(jax.jit, static_argnames=("num_graphs",))
def encoder_forward(params, x, edge_index, edge_attr, batch, num_graphs):
    N, F = x.shape
    E = edge_index.shape[1]
    Vp, D = params["atom_table"].shape
    Ve = params["edge_table"].shape[0]
    H = params["w_self"].shape[1]
    G = num_graphs

    # atom codes -> combined-vocab indices (clamped like a JAX gather)
    atom_idx = x.astype(jnp.int32) + params["atom_offsets"][None, :]
    atom_idx = jnp.clip(atom_idx, 0, Vp - 1)
    edge_idx = jnp.clip(edge_attr.astype(jnp.int32), 0, Ve - 1).reshape(E, 1)
    src = edge_index[0].astype(jnp.int32)
    dst = edge_index[1].astype(jnp.int32)
    batch_row = batch.astype(jnp.int32).reshape(1, N)

    grid_spec = pltpu.PrefetchScalarGridSpec(
        num_scalar_prefetch=2,                    # src, dst -> SMEM
        grid=(1,),
        in_specs=[
            pl.BlockSpec((N, F), lambda i, *_: (0, 0)),        # atom_idx
            pl.BlockSpec((E, 1), lambda i, *_: (0, 0)),        # edge_idx
            pl.BlockSpec((1, N), lambda i, *_: (0, 0)),        # batch row
            pl.BlockSpec((Vp, D), lambda i, *_: (0, 0)),       # atom table
            pl.BlockSpec((Ve, D), lambda i, *_: (0, 0)),       # edge table
            pl.BlockSpec((D, H), lambda i, *_: (0, 0)),        # w_msg
            pl.BlockSpec((1, H), lambda i, *_: (0, 0)),        # b_msg
            pl.BlockSpec((D, H), lambda i, *_: (0, 0)),        # w_self
            pl.BlockSpec((1, H), lambda i, *_: (0, 0)),        # b_out
        ],
        out_specs=(
            pl.BlockSpec((N, H), lambda i, *_: (0, 0)),        # nodes_reps
            pl.BlockSpec((G, H), lambda i, *_: (0, 0)),        # graph_reps
        ),
        scratch_shapes=[
            pltpu.VMEM((N, D), jnp.float32),   # x_scr
            pltpu.VMEM((E, D), jnp.float32),   # xs_scr (gathered x[src])
            pltpu.VMEM((E, H), jnp.float32),   # msg_scr
            pltpu.VMEM((N, H), jnp.float32),   # agg_scr
        ],
    )

    nodes_reps, graph_reps = pl.pallas_call(
        encoder_kernel,
        out_shape=(jax.ShapeDtypeStruct((N, H), jnp.float32),
                   jax.ShapeDtypeStruct((G, H), jnp.float32)),
        grid_spec=grid_spec,
        compiler_params=pltpu.CompilerParams(
            dimension_semantics=("arbitrary",),
            vmem_limit_bytes=32 * 1024 * 1024),   # safe on v5e/v6e/v7x
    )(src, dst, atom_idx, edge_idx, batch_row,
      params["atom_table"], params["edge_table"],
      params["w_msg"], params["b_msg"], params["w_self"], params["b_out"])
    return nodes_reps, graph_reps


# Pure-JAX reference for correctness check.
def encoder_reference(params, x, edge_index, edge_attr, batch, num_graphs):
    idx = x.astype(jnp.int32) + params["atom_offsets"][None, :]
    x_emb = jnp.sum(params["atom_table"][idx], axis=1)          # == concat
    e_emb = params["edge_table"][edge_attr.astype(jnp.int32).reshape(-1)]
    src = edge_index[0].astype(jnp.int32)
    dst = edge_index[1].astype(jnp.int32)
    msg = jnp.maximum(
        (x_emb[src] + e_emb) @ params["w_msg"] + params["b_msg"], 0.0)
    agg = jnp.zeros((x.shape[0], HIDDEN), jnp.float32).at[dst].add(msg)
    nodes = jnp.maximum(x_emb @ params["w_self"] + agg + params["b_out"], 0.0)
    sums = jnp.zeros((num_graphs, HIDDEN), jnp.float32).at[batch].add(nodes)
    counts = jnp.zeros((num_graphs, 1), jnp.float32).at[batch].add(1.0)
    return nodes, sums / jnp.maximum(counts, 1.0)


if __name__ == "__main__":
    key = jax.random.PRNGKey(0)
    pk, xk, ek, ak = jax.random.split(key, 4)
    params = init_params(pk)

    N, E, G = 16, 32, 2
    feat_cols = [
        jax.random.randint(jax.random.fold_in(xk, i), (N, 1), 0, v)
        for i, v in enumerate(ATOM_FEATURE_SIZES)
    ]
    x = jnp.concatenate(feat_cols, axis=1).astype(jnp.float32)      # data.x
    edge_index = jax.random.randint(ek, (2, E), 0, N, dtype=jnp.int32)
    edge_attr = jax.random.randint(ak, (E,), 0, EDGE_VOCAB).astype(jnp.float32)
    batch = jnp.repeat(jnp.arange(G, dtype=jnp.int32), N // G)

    nodes_reps, graph_reps = encoder_forward(params, x, edge_index, edge_attr,
                                             batch, G)
    jax.block_until_ready((nodes_reps, graph_reps))

    ref_nodes, ref_graphs = encoder_reference(params, x, edge_index, edge_attr,
                                              batch, G)
    assert nodes_reps.shape == (N, HIDDEN) and graph_reps.shape == (G, HIDDEN)
    assert jnp.allclose(nodes_reps, ref_nodes, rtol=1e-2, atol=1e-2)
    assert jnp.allclose(graph_reps, ref_graphs, rtol=1e-2, atol=1e-2)
    print("KERNEL_OK")
</pallas_src>

<mosaic_0001>
module attributes {stable_mosaic.version = 11 : i64} {
  func.func @encoder_kernel(%arg0: i32, %arg1: memref<32xi32, #tpu.memory_space<smem>>, %arg2: memref<32xi32, #tpu.memory_space<smem>>, %arg3: memref<16x4xi32, #tpu.memory_space<vmem>>, %arg4: memref<32x1xi32, #tpu.memory_space<vmem>>, %arg5: memref<1x16xi32, #tpu.memory_space<vmem>>, %arg6: memref<32x32xf32, #tpu.memory_space<vmem>>, %arg7: memref<8x32xf32, #tpu.memory_space<vmem>>, %arg8: memref<32x32xf32, #tpu.memory_space<vmem>>, %arg9: memref<1x32xf32, #tpu.memory_space<vmem>>, %arg10: memref<32x32xf32, #tpu.memory_space<vmem>>, %arg11: memref<1x32xf32, #tpu.memory_space<vmem>>, %arg12: memref<16x32xf32, #tpu.memory_space<vmem>>, %arg13: memref<2x32xf32, #tpu.memory_space<vmem>>, %arg14: memref<16x32xf32, #tpu.memory_space<vmem>>, %arg15: memref<32x32xf32, #tpu.memory_space<vmem>>, %arg16: memref<32x32xf32, #tpu.memory_space<vmem>>, %arg17: memref<16x32xf32, #tpu.memory_space<vmem>>) attributes {dimension_semantics = [#tpu.dimension_semantics<arbitrary>], iteration_bounds = array<i64: 1>, scalar_prefetch = 2 : i64, scratch_operands = 4 : i64, tpu.core_type = #tpu.core_type<tc>, window_params = [{pipeline_mode = #tpu.pipeline_mode<synchronous>, transform_indices = @transform_0, window_bounds = array<i64: 16, 4>}, {pipeline_mode = #tpu.pipeline_mode<synchronous>, transform_indices = @transform_1, window_bounds = array<i64: 32, 1>}, {pipeline_mode = #tpu.pipeline_mode<synchronous>, transform_indices = @transform_2, window_bounds = array<i64: 1, 16>}, {pipeline_mode = #tpu.pipeline_mode<synchronous>, transform_indices = @transform_3, window_bounds = array<i64: 32, 32>}, {pipeline_mode = #tpu.pipeline_mode<synchronous>, transform_indices = @transform_4, window_bounds = array<i64: 8, 32>}, {pipeline_mode = #tpu.pipeline_mode<synchronous>, transform_indices = @transform_5, window_bounds = array<i64: 32, 32>}, {pipeline_mode = #tpu.pipeline_mode<synchronous>, transform_indices = @transform_6, window_bounds = array<i64: 1, 32>}, {pipeline_mode = #tpu.pipeline_mode<synchronous>, transform_indices = @transform_7, window_bounds = array<i64: 32, 32>}, {pipeline_mode = #tpu.pipeline_mode<synchronous>, transform_indices = @transform_8, window_bounds = array<i64: 1, 32>}, {pipeline_mode = #tpu.pipeline_mode<synchronous>, transform_indices = @transform_9, window_bounds = array<i64: 16, 32>}, {pipeline_mode = #tpu.pipeline_mode<synchronous>, transform_indices = @transform_10, window_bounds = array<i64: 2, 32>}]} {
    %c0 = arith.constant 0 : index
    %c0_0 = arith.constant 0 : index
    %0 = vector.load %arg3[%c0, %c0_0] : memref<16x4xi32, #tpu.memory_space<vmem>>, vector<16x4xi32>
    %1 = tpu.iota {dimensions = array<i32: 1>} : vector<16x32xi32>
    %cst = arith.constant 0.000000e+00 : f32
    %2 = vector.broadcast %cst : f32 to vector<16x32xf32>
    %3 = vector.extract_strided_slice %0 {offsets = [0, 0], sizes = [16, 1], strides = [1, 1]} : vector<16x4xi32> to vector<16x1xi32>
    %4 = vector.broadcast %3 : vector<16x1xi32> to vector<16x32xi32>
    %5 = arith.cmpi eq, %1, %4 : vector<16x32xi32>
    %6 = arith.extui %5 : vector<16x32xi1> to vector<16x32xi32>
    %7 = arith.sitofp %6 : vector<16x32xi32> to vector<16x32xf32>
    %8 = arith.addf %2, %7 : vector<16x32xf32>
    %9 = vector.extract_strided_slice %0 {offsets = [0, 1], sizes = [16, 1], strides = [1, 1]} : vector<16x4xi32> to vector<16x1xi32>
    %10 = vector.broadcast %9 : vector<16x1xi32> to vector<16x32xi32>
    %11 = arith.cmpi eq, %1, %10 : vector<16x32xi32>
    %12 = arith.extui %11 : vector<16x32xi1> to vector<16x32xi32>
    %13 = arith.sitofp %12 : vector<16x32xi32> to vector<16x32xf32>
    %14 = arith.addf %8, %13 : vector<16x32xf32>
    %15 = vector.extract_strided_slice %0 {offsets = [0, 2], sizes = [16, 1], strides = [1, 1]} : vector<16x4xi32> to vector<16x1xi32>
    %16 = vector.broadcast %15 : vector<16x1xi32> to vector<16x32xi32>
    %17 = arith.cmpi eq, %1, %16 : vector<16x32xi32>
    %18 = arith.extui %17 : vector<16x32xi1> to vector<16x32xi32>
    %19 = arith.sitofp %18 : vector<16x32xi32> to vector<16x32xf32>
    %20 = arith.addf %14, %19 : vector<16x32xf32>
    %21 = vector.extract_strided_slice %0 {offsets = [0, 3], sizes = [16, 1], strides = [1, 1]} : vector<16x4xi32> to vector<16x1xi32>
    %22 = vector.broadcast %21 : vector<16x1xi32> to vector<16x32xi32>
    %23 = arith.cmpi eq, %1, %22 : vector<16x32xi32>
    %24 = arith.extui %23 : vector<16x32xi1> to vector<16x32xi32>
    %25 = arith.sitofp %24 : vector<16x32xi32> to vector<16x32xf32>
    %26 = arith.addf %20, %25 : vector<16x32xf32>
    %c0_1 = arith.constant 0 : index
    %c0_2 = arith.constant 0 : index
    %27 = vector.load %arg6[%c0_1, %c0_2] : memref<32x32xf32, #tpu.memory_space<vmem>>, vector<32x32xf32>
    %cst_3 = arith.constant dense<0.000000e+00> : vector<16x32xf32>
    %28 = tpu.matmul %26, %27, %cst_3 {dimension_numbers = #tpu.dot_dimension_numbers<[1], [0], [0], [1], [0, 0, 1, 1], [], []>} : vector<16x32xf32>, vector<32x32xf32>, vector<16x32xf32> -> vector<16x32xf32>
    %c0_4 = arith.constant 0 : index
    %c0_5 = arith.constant 0 : index
    %29 = vector.load %arg14[%c0_4, %c0_5] : memref<16x32xf32, #tpu.memory_space<vmem>>, vector<16x32xf32>
    tpu.vector_store %arg14[%c0_4, %c0_5], %28 {strides = array<i32>} : memref<16x32xf32, #tpu.memory_space<vmem>>, vector<16x32xf32>,
    %30 = tpu.iota {dimensions = array<i32: 1>} : vector<32x8xi32>
    %c0_6 = arith.constant 0 : index
    %c0_7 = arith.constant 0 : index
    %31 = vector.load %arg4[%c0_6, %c0_7] : memref<32x1xi32, #tpu.memory_space<vmem>>, vector<32x1xi32>
    %32 = vector.broadcast %31 : vector<32x1xi32> to vector<32x8xi32>
    %33 = arith.cmpi eq, %30, %32 : vector<32x8xi32>
    %34 = arith.extui %33 : vector<32x8xi1> to vector<32x8xi32>
    %35 = arith.sitofp %34 : vector<32x8xi32> to vector<32x8xf32>
    %c0_8 = arith.constant 0 : index
    %c0_9 = arith.constant 0 : index
    %36 = vector.load %arg7[%c0_8, %c0_9] : memref<8x32xf32, #tpu.memory_space<vmem>>, vector<8x32xf32>
    %cst_10 = arith.constant dense<0.000000e+00> : vector<32x32xf32>
    %37 = tpu.matmul %35, %36, %cst_10 {dimension_numbers = #tpu.dot_dimension_numbers<[1], [0], [0], [1], [0, 0, 1, 1], [], []>} : vector<32x8xf32>, vector<8x32xf32>, vector<32x32xf32> -> vector<32x32xf32>
    %c0_i32 = arith.constant 0 : i32
    %38 = arith.index_cast %c0_i32 : i32 to index
    %39 = memref.load %arg1[%38] : memref<32xi32, #tpu.memory_space<smem>>
    %40 = arith.index_cast %39 : i32 to index
    %c0_11 = arith.constant 0 : index
    %41 = vector.load %arg14[%40, %c0_11] : memref<16x32xf32, #tpu.memory_space<vmem>>, vector<1x32xf32>
    %42 = arith.index_cast %c0_i32 : i32 to index
    %c0_12 = arith.constant 0 : index
    %43 = vector.load %arg15[%42, %c0_12] : memref<32x32xf32, #tpu.memory_space<vmem>>, vector<1x32xf32>
    tpu.vector_store %arg15[%42, %c0_12], %41 {strides = array<i32>} : memref<32x32xf32, #tpu.memory_space<vmem>>, vector<1x32xf32>,
    %c1_i32 = arith.constant 1 : i32
    %44 = arith.index_cast %c1_i32 : i32 to index
    %45 = memref.load %arg1[%44] : memref<32xi32, #tpu.memory_space<smem>>
    %46 = arith.index_cast %45 : i32 to index
    %c0_13 = arith.constant 0 : index
    %47 = vector.load %arg14[%46, %c0_13] : memref<16x32xf32, #tpu.memory_space<vmem>>, vector<1x32xf32>
    %48 = arith.index_cast %c1_i32 : i32 to index
    %c0_14 = arith.constant 0 : index
    %49 = vector.load %arg15[%48, %c0_14] : memref<32x32xf32, #tpu.memory_space<vmem>>, vector<1x32xf32>
    tpu.vector_store %arg15[%48, %c0_14], %47 {strides = array<i32>} : memref<32x32xf32, #tpu.memory_space<vmem>>, vector<1x32xf32>,
    %c2_i32 = arith.constant 2 : i32
    %50 = arith.index_cast %c2_i32 : i32 to index
    %51 = memref.load %arg1[%50] : memref<32xi32, #tpu.memory_space<smem>>
    %52 = arith.index_cast %51 : i32 to index
    %c0_15 = arith.constant 0 : index
    %53 = vector.load %arg14[%52, %c0_15] : memref<16x32xf32, #tpu.memory_space<vmem>>, vector<1x32xf32>
    %54 = arith.index_cast %c2_i32 : i32 to index
    %c0_16 = arith.constant 0 : index
    %55 = vector.load %arg15[%54, %c0_16] : memref<32x32xf32, #tpu.memory_space<vmem>>, vector<1x32xf32>
    tpu.vector_store %arg15[%54, %c0_16], %53 {strides = array<i32>} : memref<32x32xf32, #tpu.memory_space<vmem>>, vector<1x32xf32>,
    %c3_i32 = arith.constant 3 : i32
    %56 = arith.index_cast %c3_i32 : i32 to index
    %57 = memref.load %arg1[%56] : memref<32xi32, #tpu.memory_space<smem>>
    %58 = arith.index_cast %57 : i32 to index
    %c0_17 = arith.constant 0 : index
    %59 = vector.load %arg14[%58, %c0_17] : memref<16x32xf32, #tpu.memory_space<vmem>>, vector<1x32xf32>
    %60 = arith.index_cast %c3_i32 : i32 to index
    %c0_18 = arith.constant 0 : index
    %61 = vector.load %arg15[%60, %c0_18] : memref<32x32xf32, #tpu.memory_space<vmem>>, vector<1x32xf32>
    tpu.vector_store %arg15[%60, %c0_18], %59 {strides = array<i32>} : memref<32x32xf32, #tpu.memory_space<vmem>>, vector<1x32xf32>,
    %c4_i32 = arith.constant 4 : i32
    %62 = arith.index_cast %c4_i32 : i32 to index
    %63 = memref.load %arg1[%62] : memref<32xi32, #tpu.memory_space<smem>>
    %64 = arith.index_cast %63 : i32 to index
    %c0_19 = arith.constant 0 : index
    %65 = vector.load %arg14[%64, %c0_19] : memref<16x32xf32, #tpu.memory_space<vmem>>, vector<1x32xf32>
    %66 = arith.index_cast %c4_i32 : i32 to index
    %c0_20 = arith.constant 0 : index
    %67 = vector.load %arg15[%66, %c0_20] : memref<32x32xf32, #tpu.memory_space<vmem>>, vector<1x32xf32>
    tpu.vector_store %arg15[%66, %c0_20], %65 {strides = array<i32>} : memref<32x32xf32, #tpu.memory_space<vmem>>, vector<1x32xf32>,
    %c5_i32 = arith.constant 5 : i32
    %68 = arith.index_cast %c5_i32 : i32 to index
    %69 = memref.load %arg1[%68] : memref<32xi32, #tpu.memory_space<smem>>
    %70 = arith.index_cast %69 : i32 to index
    %c0_21 = arith.constant 0 : index
    %71 = vector.load %arg14[%70, %c0_21] : memref<16x32xf32, #tpu.memory_space<vmem>>, vector<1x32xf32>
    %72 = arith.index_cast %c5_i32 : i32 to index
    %c0_22 = arith.constant 0 : index
    %73 = vector.load %arg15[%72, %c0_22] : memref<32x32xf32, #tpu.memory_space<vmem>>, vector<1x32xf32>
    tpu.vector_store %arg15[%72, %c0_22], %71 {strides = array<i32>} : memref<32x32xf32, #tpu.memory_space<vmem>>, vector<1x32xf32>,
    %c6_i32 = arith.constant 6 : i32
    %74 = arith.index_cast %c6_i32 : i32 to index
    %75 = memref.load %arg1[%74] : memref<32xi32, #tpu.memory_space<smem>>
    %76 = arith.index_cast %75 : i32 to index
    %c0_23 = arith.constant 0 : index
    %77 = vector.load %arg14[%76, %c0_23] : memref<16x32xf32, #tpu.memory_space<vmem>>, vector<1x32xf32>
    %78 = arith.index_cast %c6_i32 : i32 to index
    %c0_24 = arith.constant 0 : index
    %79 = vector.load %arg15[%78, %c0_24] : memref<32x32xf32, #tpu.memory_space<vmem>>, vector<1x32xf32>
    tpu.vector_store %arg15[%78, %c0_24], %77 {strides = array<i32>} : memref<32x32xf32, #tpu.memory_space<vmem>>, vector<1x32xf32>,
    %c7_i32 = arith.constant 7 : i32
    %80 = arith.index_cast %c7_i32 : i32 to index
    %81 = memref.load %arg1[%80] : memref<32xi32, #tpu.memory_space<smem>>
    %82 = arith.index_cast %81 : i32 to index
    %c0_25 = arith.constant 0 : index
    %83 = vector.load %arg14[%82, %c0_25] : memref<16x32xf32, #tpu.memory_space<vmem>>, vector<1x32xf32>
    %84 = arith.index_cast %c7_i32 : i32 to index
    %c0_26 = arith.constant 0 : index
    %85 = vector.load %arg15[%84, %c0_26] : memref<32x32xf32, #tpu.memory_space<vmem>>, vector<1x32xf32>
    tpu.vector_store %arg15[%84, %c0_26], %83 {strides = array<i32>} : memref<32x32xf32, #tpu.memory_space<vmem>>, vector<1x32xf32>,
    %c8_i32 = arith.constant 8 : i32
    %86 = arith.index_cast %c8_i32 : i32 to index
    %87 = memref.load %arg1[%86] : memref<32xi32, #tpu.memory_space<smem>>
    %88 = arith.index_cast %87 : i32 to index
    %c0_27 = arith.constant 0 : index
    %89 = vector.load %arg14[%88, %c0_27] : memref<16x32xf32, #tpu.memory_space<vmem>>, vector<1x32xf32>
    %90 = arith.index_cast %c8_i32 : i32 to index
    %c0_28 = arith.constant 0 : index
    %91 = vector.load %arg15[%90, %c0_28] : memref<32x32xf32, #tpu.memory_space<vmem>>, vector<1x32xf32>
    tpu.vector_store %arg15[%90, %c0_28], %89 {strides = array<i32>} : memref<32x32xf32, #tpu.memory_space<vmem>>, vector<1x32xf32>,
    %c9_i32 = arith.constant 9 : i32
    %92 = arith.index_cast %c9_i32 : i32 to index
    %93 = memref.load %arg1[%92] : memref<32xi32, #tpu.memory_space<smem>>
    %94 = arith.index_cast %93 : i32 to index
    %c0_29 = arith.constant 0 : index
    %95 = vector.load %arg14[%94, %c0_29] : memref<16x32xf32, #tpu.memory_space<vmem>>, vector<1x32xf32>
    %96 = arith.index_cast %c9_i32 : i32 to index
    %c0_30 = arith.constant 0 : index
    %97 = vector.load %arg15[%96, %c0_30] : memref<32x32xf32, #tpu.memory_space<vmem>>, vector<1x32xf32>
    tpu.vector_store %arg15[%96, %c0_30], %95 {strides = array<i32>} : memref<32x32xf32, #tpu.memory_space<vmem>>, vector<1x32xf32>,
    %c10_i32 = arith.constant 10 : i32
    %98 = arith.index_cast %c10_i32 : i32 to index
    %99 = memref.load %arg1[%98] : memref<32xi32, #tpu.memory_space<smem>>
    %100 = arith.index_cast %99 : i32 to index
    %c0_31 = arith.constant 0 : index
    %101 = vector.load %arg14[%100, %c0_31] : memref<16x32xf32, #tpu.memory_space<vmem>>, vector<1x32xf32>
    %102 = arith.index_cast %c10_i32 : i32 to index
    %c0_32 = arith.constant 0 : index
    %103 = vector.load %arg15[%102, %c0_32] : memref<32x32xf32, #tpu.memory_space<vmem>>, vector<1x32xf32>
    tpu.vector_store %arg15[%102, %c0_32], %101 {strides = array<i32>} : memref<32x32xf32, #tpu.memory_space<vmem>>, vector<1x32xf32>,
    %c11_i32 = arith.constant 11 : i32
    %104 = arith.index_cast %c11_i32 : i32 to index
    %105 = memref.load %arg1[%104] : memref<32xi32, #tpu.memory_space<smem>>
    %106 = arith.index_cast %105 : i32 to index
    %c0_33 = arith.constant 0 : index
    %107 = vector.load %arg14[%106, %c0_33] : memref<16x32xf32, #tpu.memory_space<vmem>>, vector<1x32xf32>
    %108 = arith.index_cast %c11_i32 : i32 to index
    %c0_34 = arith.constant 0 : index
    %109 = vector.load %arg15[%108, %c0_34] : memref<32x32xf32, #tpu.memory_space<vmem>>, vector<1x32xf32>
    tpu.vector_store %arg15[%108, %c0_34], %107 {strides = array<i32>} : memref<32x32xf32, #tpu.memory_space<vmem>>, vector<1x32xf32>,
    %c12_i32 = arith.constant 12 : i32
    %110 = arith.index_cast %c12_i32 : i32 to index
    %111 = memref.load %arg1[%110] : memref<32xi32, #tpu.memory_space<smem>>
    %112 = arith.index_cast %111 : i32 to index
    %c0_35 = arith.constant 0 : index
    %113 = vector.load %arg14[%112, %c0_35] : memref<16x32xf32, #tpu.memory_space<vmem>>, vector<1x32xf32>
    %114 = arith.index_cast %c12_i32 : i32 to index
    %c0_36 = arith.constant 0 : index
    %115 = vector.load %arg15[%114, %c0_36] : memref<32x32xf32, #tpu.memory_space<vmem>>, vector<1x32xf32>
    tpu.vector_store %arg15[%114, %c0_36], %113 {strides = array<i32>} : memref<32x32xf32, #tpu.memory_space<vmem>>, vector<1x32xf32>,
    %c13_i32 = arith.constant 13 : i32
    %116 = arith.index_cast %c13_i32 : i32 to index
    %117 = memref.load %arg1[%116] : memref<32xi32, #tpu.memory_space<smem>>
    %118 = arith.index_cast %117 : i32 to index
    %c0_37 = arith.constant 0 : index
    %119 = vector.load %arg14[%118, %c0_37] : memref<16x32xf32, #tpu.memory_space<vmem>>, vector<1x32xf32>
    %120 = arith.index_cast %c13_i32 : i32 to index
    %c0_38 = arith.constant 0 : index
    %121 = vector.load %arg15[%120, %c0_38] : memref<32x32xf32, #tpu.memory_space<vmem>>, vector<1x32xf32>
    tpu.vector_store %arg15[%120, %c0_38], %119 {strides = array<i32>} : memref<32x32xf32, #tpu.memory_space<vmem>>, vector<1x32xf32>,
    %c14_i32 = arith.constant 14 : i32
    %122 = arith.index_cast %c14_i32 : i32 to index
    %123 = memref.load %arg1[%122] : memref<32xi32, #tpu.memory_space<smem>>
    %124 = arith.index_cast %123 : i32 to index
    %c0_39 = arith.constant 0 : index
    %125 = vector.load %arg14[%124, %c0_39] : memref<16x32xf32, #tpu.memory_space<vmem>>, vector<1x32xf32>
    %126 = arith.index_cast %c14_i32 : i32 to index
    %c0_40 = arith.constant 0 : index
    %127 = vector.load %arg15[%126, %c0_40] : memref<32x32xf32, #tpu.memory_space<vmem>>, vector<1x32xf32>
    tpu.vector_store %arg15[%126, %c0_40], %125 {strides = array<i32>} : memref<32x32xf32, #tpu.memory_space<vmem>>, vector<1x32xf32>,
    %c15_i32 = arith.constant 15 : i32
    %128 = arith.index_cast %c15_i32 : i32 to index
    %129 = memref.load %arg1[%128] : memref<32xi32, #tpu.memory_space<smem>>
    %130 = arith.index_cast %129 : i32 to index
    %c0_41 = arith.constant 0 : index
    %131 = vector.load %arg14[%130, %c0_41] : memref<16x32xf32, #tpu.memory_space<vmem>>, vector<1x32xf32>
    %132 = arith.index_cast %c15_i32 : i32 to index
    %c0_42 = arith.constant 0 : index
    %133 = vector.load %arg15[%132, %c0_42] : memref<32x32xf32, #tpu.memory_space<vmem>>, vector<1x32xf32>
    tpu.vector_store %arg15[%132, %c0_42], %131 {strides = array<i32>} : memref<32x32xf32, #tpu.memory_space<vmem>>, vector<1x32xf32>,
    %c16_i32 = arith.constant 16 : i32
    %134 = arith.index_cast %c16_i32 : i32 to index
    %135 = memref.load %arg1[%134] : memref<32xi32, #tpu.memory_space<smem>>
    %136 = arith.index_cast %135 : i32 to index
    %c0_43 = arith.constant 0 : index
    %137 = vector.load %arg14[%136, %c0_43] : memref<16x32xf32, #tpu.memory_space<vmem>>, vector<1x32xf32>
    %138 = arith.index_cast %c16_i32 : i32 to index
    %c0_44 = arith.constant 0 : index
    %139 = vector.load %arg15[%138, %c0_44] : memref<32x32xf32, #tpu.memory_space<vmem>>, vector<1x32xf32>
    tpu.vector_store %arg15[%138, %c0_44], %137 {strides = array<i32>} : memref<32x32xf32, #tpu.memory_space<vmem>>, vector<1x32xf32>,
    %c17_i32 = arith.constant 17 : i32
    %140 = arith.index_cast %c17_i32 : i32 to index
    %141 = memref.load %arg1[%140] : memref<32xi32, #tpu.memory_space<smem>>
    %142 = arith.index_cast %141 : i32 to index
    %c0_45 = arith.constant 0 : index
    %143 = vector.load %arg14[%142, %c0_45] : memref<16x32xf32, #tpu.memory_space<vmem>>, vector<1x32xf32>
    %144 = arith.index_cast %c17_i32 : i32 to index
    %c0_46 = arith.constant 0 : index
    %145 = vector.load %arg15[%144, %c0_46] : memref<32x32xf32, #tpu.memory_space<vmem>>, vector<1x32xf32>
    tpu.vector_store %arg15[%144, %c0_46], %143 {strides = array<i32>} : memref<32x32xf32, #tpu.memory_space<vmem>>, vector<1x32xf32>,
    %c18_i32 = arith.constant 18 : i32
    %146 = arith.index_cast %c18_i32 : i32 to index
    %147 = memref.load %arg1[%146] : memref<32xi32, #tpu.memory_space<smem>>
    %148 = arith.index_cast %147 : i32 to index
    %c0_47 = arith.constant 0 : index
    %149 = vector.load %arg14[%148, %c0_47] : memref<16x32xf32, #tpu.memory_space<vmem>>, vector<1x32xf32>
    %150 = arith.index_cast %c18_i32 : i32 to index
    %c0_48 = arith.constant 0 : index
    %151 = vector.load %arg15[%150, %c0_48] : memref<32x32xf32, #tpu.memory_space<vmem>>, vector<1x32xf32>
    tpu.vector_store %arg15[%150, %c0_48], %149 {strides = array<i32>} : memref<32x32xf32, #tpu.memory_space<vmem>>, vector<1x32xf32>,
    %c19_i32 = arith.constant 19 : i32
    %152 = arith.index_cast %c19_i32 : i32 to index
    %153 = memref.load %arg1[%152] : memref<32xi32, #tpu.memory_space<smem>>
    %154 = arith.index_cast %153 : i32 to index
    %c0_49 = arith.constant 0 : index
    %155 = vector.load %arg14[%154, %c0_49] : memref<16x32xf32, #tpu.memory_space<vmem>>, vector<1x32xf32>
    %156 = arith.index_cast %c19_i32 : i32 to index
    %c0_50 = arith.constant 0 : index
    %157 = vector.load %arg15[%156, %c0_50] : memref<32x32xf32, #tpu.memory_space<vmem>>, vector<1x32xf32>
    tpu.vector_store %arg15[%156, %c0_50], %155 {strides = array<i32>} : memref<32x32xf32, #tpu.memory_space<vmem>>, vector<1x32xf32>,
    %c20_i32 = arith.constant 20 : i32
    %158 = arith.index_cast %c20_i32 : i32 to index
    %159 = memref.load %arg1[%158] : memref<32xi32, #tpu.memory_space<smem>>
    %160 = arith.index_cast %159 : i32 to index
    %c0_51 = arith.constant 0 : index
    %161 = vector.load %arg14[%160, %c0_51] : memref<16x32xf32, #tpu.memory_space<vmem>>, vector<1x32xf32>
    %162 = arith.index_cast %c20_i32 : i32 to index
    %c0_52 = arith.constant 0 : index
    %163 = vector.load %arg15[%162, %c0_52] : memref<32x32xf32, #tpu.memory_space<vmem>>, vector<1x32xf32>
    tpu.vector_store %arg15[%162, %c0_52], %161 {strides = array<i32>} : memref<32x32xf32, #tpu.memory_space<vmem>>, vector<1x32xf32>,
    %c21_i32 = arith.constant 21 : i32
    %164 = arith.index_cast %c21_i32 : i32 to index
    %165 = memref.load %arg1[%164] : memref<32xi32, #tpu.memory_space<smem>>
    %166 = arith.index_cast %165 : i32 to index
    %c0_53 = arith.constant 0 : index
    %167 = vector.load %arg14[%166, %c0_53] : memref<16x32xf32, #tpu.memory_space<vmem>>, vector<1x32xf32>
    %168 = arith.index_cast %c21_i32 : i32 to index
    %c0_54 = arith.constant 0 : index
    %169 = vector.load %arg15[%168, %c0_54] : memref<32x32xf32, #tpu.memory_space<vmem>>, vector<1x32xf32>
    tpu.vector_store %arg15[%168, %c0_54], %167 {strides = array<i32>} : memref<32x32xf32, #tpu.memory_space<vmem>>, vector<1x32xf32>,
    %c22_i32 = arith.constant 22 : i32
    %170 = arith.index_cast %c22_i32 : i32 to index
    %171 = memref.load %arg1[%170] : memref<32xi32, #tpu.memory_space<smem>>
    %172 = arith.index_cast %171 : i32 to index
    %c0_55 = arith.constant 0 : index
    %173 = vector.load %arg14[%172, %c0_55] : memref<16x32xf32, #tpu.memory_space<vmem>>, vector<1x32xf32>
    %174 = arith.index_cast %c22_i32 : i32 to index
    %c0_56 = arith.constant 0 : index
    %175 = vector.load %arg15[%174, %c0_56] : memref<32x32xf32, #tpu.memory_space<vmem>>, vector<1x32xf32>
    tpu.vector_store %arg15[%174, %c0_56], %173 {strides = array<i32>} : memref<32x32xf32, #tpu.memory_space<vmem>>, vector<1x32xf32>,
    %c23_i32 = arith.constant 23 : i32
    %176 = arith.index_cast %c23_i32 : i32 to index
    %177 = memref.load %arg1[%176] : memref<32xi32, #tpu.memory_space<smem>>
    %178 = arith.index_cast %177 : i32 to index
    %c0_57 = arith.constant 0 : index
    %179 = vector.load %arg14[%178, %c0_57] : memref<16x32xf32, #tpu.memory_space<vmem>>, vector<1x32xf32>
    %180 = arith.index_cast %c23_i32 : i32 to index
    %c0_58 = arith.constant 0 : index
    %181 = vector.load %arg15[%180, %c0_58] : memref<32x32xf32, #tpu.memory_space<vmem>>, vector<1x32xf32>
    tpu.vector_store %arg15[%180, %c0_58], %179 {strides = array<i32>} : memref<32x32xf32, #tpu.memory_space<vmem>>, vector<1x32xf32>,
    %c24_i32 = arith.constant 24 : i32
    %182 = arith.index_cast %c24_i32 : i32 to index
    %183 = memref.load %arg1[%182] : memref<32xi32, #tpu.memory_space<smem>>
    %184 = arith.index_cast %183 : i32 to index
    %c0_59 = arith.constant 0 : index
    %185 = vector.load %arg14[%184, %c0_59] : memref<16x32xf32, #tpu.memory_space<vmem>>, vector<1x32xf32>
    %186 = arith.index_cast %c24_i32 : i32 to index
    %c0_60 = arith.constant 0 : index
    %187 = vector.load %arg15[%186, %c0_60] : memref<32x32xf32, #tpu.memory_space<vmem>>, vector<1x32xf32>
    tpu.vector_store %arg15[%186, %c0_60], %185 {strides = array<i32>} : memref<32x32xf32, #tpu.memory_space<vmem>>, vector<1x32xf32>,
    %c25_i32 = arith.constant 25 : i32
    %188 = arith.index_cast %c25_i32 : i32 to index
    %189 = memref.load %arg1[%188] : memref<32xi32, #tpu.memory_space<smem>>
    %190 = arith.index_cast %189 : i32 to index
    %c0_61 = arith.constant 0 : index
    %191 = vector.load %arg14[%190, %c0_61] : memref<16x32xf32, #tpu.memory_space<vmem>>, vector<1x32xf32>
    %192 = arith.index_cast %c25_i32 : i32 to index
    %c0_62 = arith.constant 0 : index
    %193 = vector.load %arg15[%192, %c0_62] : memref<32x32xf32, #tpu.memory_space<vmem>>, vector<1x32xf32>
    tpu.vector_store %arg15[%192, %c0_62], %191 {strides = array<i32>} : memref<32x32xf32, #tpu.memory_space<vmem>>, vector<1x32xf32>,
    %c26_i32 = arith.constant 26 : i32
    %194 = arith.index_cast %c26_i32 : i32 to index
    %195 = memref.load %arg1[%194] : memref<32xi32, #tpu.memory_space<smem>>
    %196 = arith.index_cast %195 : i32 to index
    %c0_63 = arith.constant 0 : index
    %197 = vector.load %arg14[%196, %c0_63] : memref<16x32xf32, #tpu.memory_space<vmem>>, vector<1x32xf32>
    %198 = arith.index_cast %c26_i32 : i32 to index
    %c0_64 = arith.constant 0 : index
    %199 = vector.load %arg15[%198, %c0_64] : memref<32x32xf32, #tpu.memory_space<vmem>>, vector<1x32xf32>
    tpu.vector_store %arg15[%198, %c0_64], %197 {strides = array<i32>} : memref<32x32xf32, #tpu.memory_space<vmem>>, vector<1x32xf32>,
    %c27_i32 = arith.constant 27 : i32
    %200 = arith.index_cast %c27_i32 : i32 to index
    %201 = memref.load %arg1[%200] : memref<32xi32, #tpu.memory_space<smem>>
    %202 = arith.index_cast %201 : i32 to index
    %c0_65 = arith.constant 0 : index
    %203 = vector.load %arg14[%202, %c0_65] : memref<16x32xf32, #tpu.memory_space<vmem>>, vector<1x32xf32>
    %204 = arith.index_cast %c27_i32 : i32 to index
    %c0_66 = arith.constant 0 : index
    %205 = vector.load %arg15[%204, %c0_66] : memref<32x32xf32, #tpu.memory_space<vmem>>, vector<1x32xf32>
    tpu.vector_store %arg15[%204, %c0_66], %203 {strides = array<i32>} : memref<32x32xf32, #tpu.memory_space<vmem>>, vector<1x32xf32>,
    %c28_i32 = arith.constant 28 : i32
    %206 = arith.index_cast %c28_i32 : i32 to index
    %207 = memref.load %arg1[%206] : memref<32xi32, #tpu.memory_space<smem>>
    %208 = arith.index_cast %207 : i32 to index
    %c0_67 = arith.constant 0 : index
    %209 = vector.load %arg14[%208, %c0_67] : memref<16x32xf32, #tpu.memory_space<vmem>>, vector<1x32xf32>
    %210 = arith.index_cast %c28_i32 : i32 to index
    %c0_68 = arith.constant 0 : index
    %211 = vector.load %arg15[%210, %c0_68] : memref<32x32xf32, #tpu.memory_space<vmem>>, vector<1x32xf32>
    tpu.vector_store %arg15[%210, %c0_68], %209 {strides = array<i32>} : memref<32x32xf32, #tpu.memory_space<vmem>>, vector<1x32xf32>,
    %c29_i32 = arith.constant 29 : i32
    %212 = arith.index_cast %c29_i32 : i32 to index
    %213 = memref.load %arg1[%212] : memref<32xi32, #tpu.memory_space<smem>>
    %214 = arith.index_cast %213 : i32 to index
    %c0_69 = arith.constant 0 : index
    %215 = vector.load %arg14[%214, %c0_69] : memref<16x32xf32, #tpu.memory_space<vmem>>, vector<1x32xf32>
    %216 = arith.index_cast %c29_i32 : i32 to index
    %c0_70 = arith.constant 0 : index
    %217 = vector.load %arg15[%216, %c0_70] : memref<32x32xf32, #tpu.memory_space<vmem>>, vector<1x32xf32>
    tpu.vector_store %arg15[%216, %c0_70], %215 {strides = array<i32>} : memref<32x32xf32, #tpu.memory_space<vmem>>, vector<1x32xf32>,
    %c30_i32 = arith.constant 30 : i32
    %218 = arith.index_cast %c30_i32 : i32 to index
    %219 = memref.load %arg1[%218] : memref<32xi32, #tpu.memory_space<smem>>
    %220 = arith.index_cast %219 : i32 to index
    %c0_71 = arith.constant 0 : index
    %221 = vector.load %arg14[%220, %c0_71] : memref<16x32xf32, #tpu.memory_space<vmem>>, vector<1x32xf32>
    %222 = arith.index_cast %c30_i32 : i32 to index
    %c0_72 = arith.constant 0 : index
    %223 = vector.load %arg15[%222, %c0_72] : memref<32x32xf32, #tpu.memory_space<vmem>>, vector<1x32xf32>
    tpu.vector_store %arg15[%222, %c0_72], %221 {strides = array<i32>} : memref<32x32xf32, #tpu.memory_space<vmem>>, vector<1x32xf32>,
    %c31_i32 = arith.constant 31 : i32
    %224 = arith.index_cast %c31_i32 : i32 to index
    %225 = memref.load %arg1[%224] : memref<32xi32, #tpu.memory_space<smem>>
    %226 = arith.index_cast %225 : i32 to index
    %c0_73 = arith.constant 0 : index
    %227 = vector.load %arg14[%226, %c0_73] : memref<16x32xf32, #tpu.memory_space<vmem>>, vector<1x32xf32>
    %228 = arith.index_cast %c31_i32 : i32 to index
    %c0_74 = arith.constant 0 : index
    %229 = vector.load %arg15[%228, %c0_74] : memref<32x32xf32, #tpu.memory_space<vmem>>, vector<1x32xf32>
    tpu.vector_store %arg15[%228, %c0_74], %227 {strides = array<i32>} : memref<32x32xf32, #tpu.memory_space<vmem>>, vector<1x32xf32>,
    %c32_i32 = arith.constant 32 : i32
    %c0_75 = arith.constant 0 : index
    %c0_76 = arith.constant 0 : index
    %230 = vector.load %arg15[%c0_75, %c0_76] : memref<32x32xf32, #tpu.memory_space<vmem>>, vector<32x32xf32>
    %231 = arith.addf %230, %37 : vector<32x32xf32>
    %c0_77 = arith.constant 0 : index
    %c0_78 = arith.constant 0 : index
    %232 = vector.load %arg8[%c0_77, %c0_78] : memref<32x32xf32, #tpu.memory_space<vmem>>, vector<32x32xf32>
    %cst_79 = arith.constant dense<0.000000e+00> : vector<32x32xf32>
    %233 = tpu.matmul %231, %232, %cst_79 {dimension_numbers = #tpu.dot_dimension_numbers<[1], [0], [0], [1], [0, 0, 1, 1], [], []>} : vector<32x32xf32>, vector<32x32xf32>, vector<32x32xf32> -> vector<32x32xf32>
    %c0_80 = arith.constant 0 : index
    %c0_81 = arith.constant 0 : index
    %234 = vector.load %arg9[%c0_80, %c0_81] : memref<1x32xf32, #tpu.memory_space<vmem>>, vector<1x32xf32>
    %235 = vector.broadcast %234 : vector<1x32xf32> to vector<32x32xf32>
    %236 = arith.addf %233, %235 : vector<32x32xf32>
    %cst_82 = arith.constant 0.000000e+00 : f32
    %237 = vector.broadcast %cst_82 : f32 to vector<32x32xf32>
    %238 = arith.maximumf %236, %237 : vector<32x32xf32>
    %c0_83 = arith.constant 0 : index
    %c0_84 = arith.constant 0 : index
    %239 = vector.load %arg16[%c0_83, %c0_84] : memref<32x32xf32, #tpu.memory_space<vmem>>, vector<32x32xf32>
    tpu.vector_store %arg16[%c0_83, %c0_84], %238 {strides = array<i32>} : memref<32x32xf32, #tpu.memory_space<vmem>>, vector<32x32xf32>,
    %cst_85 = arith.constant 0.000000e+00 : f32
    %240 = vector.broadcast %cst_85 : f32 to vector<16x32xf32>
    %c0_86 = arith.constant 0 : index
    %c0_87 = arith.constant 0 : index
    %241 = vector.load %arg17[%c0_86, %c0_87] : memref<16x32xf32, #tpu.memory_space<vmem>>, vector<16x32xf32>
    tpu.vector_store %arg17[%c0_86, %c0_87], %240 {strides = array<i32>} : memref<16x32xf32, #tpu.memory_space<vmem>>, vector<16x32xf32>,
    %c0_i32_88 = arith.constant 0 : i32
    %242 = arith.index_cast %c0_i32_88 : i32 to index
    %243 = memref.load %arg2[%242] : memref<32xi32, #tpu.memory_space<smem>>
    %244 = arith.index_cast %243 : i32 to index
    %c0_89 = arith.constant 0 : index
    %245 = vector.load %arg17[%244, %c0_89] : memref<16x32xf32, #tpu.memory_space<vmem>>, vector<1x32xf32>
    %246 = arith.index_cast %c0_i32_88 : i32 to index
    %c0_90 = arith.constant 0 : index
    %247 = vector.load %arg16[%246, %c0_90] : memref<32x32xf32, #tpu.memory_space<vmem>>, vector<1x32xf32>
    %248 = arith.addf %245, %247 : vector<1x32xf32>
    %249 = arith.index_cast %243 : i32 to index
    %c0_91 = arith.constant 0 : index
    %250 = vector.load %arg17[%249, %c0_91] : memref<16x32xf32, #tpu.memory_space<vmem>>, vector<1x32xf32>
    tpu.vector_store %arg17[%249, %c0_91], %248 {strides = array<i32>} : memref<16x32xf32, #tpu.memory_space<vmem>>, vector<1x32xf32>,
    %c1_i32_92 = arith.constant 1 : i32
    %251 = arith.index_cast %c1_i32_92 : i32 to index
    %252 = memref.load %arg2[%251] : memref<32xi32, #tpu.memory_space<smem>>
    %253 = arith.index_cast %252 : i32 to index
    %c0_93 = arith.constant 0 : index
    %254 = vector.load %arg17[%253, %c0_93] : memref<16x32xf32, #tpu.memory_space<vmem>>, vector<1x32xf32>
    %255 = arith.index_cast %c1_i32_92 : i32 to index
    %c0_94 = arith.constant 0 : index
    %256 = vector.load %arg16[%255, %c0_94] : memref<32x32xf32, #tpu.memory_space<vmem>>, vector<1x32xf32>
    %257 = arith.addf %254, %256 : vector<1x32xf32>
    %258 = arith.index_cast %252 : i32 to index
    %c0_95 = arith.constant 0 : index
    %259 = vector.load %arg17[%258, %c0_95] : memref<16x32xf32, #tpu.memory_space<vmem>>, vector<1x32xf32>
    tpu.vector_store %arg17[%258, %c0_95], %257 {strides = array<i32>} : memref<16x32xf32, #tpu.memory_space<vmem>>, vector<1x32xf32>,
    %c2_i32_96 = arith.constant 2 : i32
    %260 = arith.index_cast %c2_i32_96 : i32 to index
    %261 = memref.load %arg2[%260] : memref<32xi32, #tpu.memory_space<smem>>
    %262 = arith.index_cast %261 : i32 to index
    %c0_97 = arith.constant 0 : index
    %263 = vector.load %arg17[%262, %c0_97] : memref<16x32xf32, #tpu.memory_space<vmem>>, vector<1x32xf32>
    %264 = arith.index_cast %c2_i32_96 : i32 to index
    %c0_98 = arith.constant 0 : index
    %265 = vector.load %arg16[%264, %c0_98] : memref<32x32xf32, #tpu.memory_space<vmem>>, vector<1x32xf32>
    %266 = arith.addf %263, %265 : vector<1x32xf32>
    %267 = arith.index_cast %261 : i32 to index
    %c0_99 = arith.constant 0 : index
    %268 = vector.load %arg17[%267, %c0_99] : memref<16x32xf32, #tpu.memory_space<vmem>>, vector<1x32xf32>
    tpu.vector_store %arg17[%267, %c0_99], %266 {strides = array<i32>} : memref<16x32xf32, #tpu.memory_space<vmem>>, vector<1x32xf32>,
    %c3_i32_100 = arith.constant 3 : i32
    %269 = arith.index_cast %c3_i32_100 : i32 to index
    %270 = memref.load %arg2[%269] : memref<32xi32, #tpu.memory_space<smem>>
    %271 = arith.index_cast %270 : i32 to index
    %c0_101 = arith.constant 0 : index
    %272 = vector.load %arg17[%271, %c0_101] : memref<16x32xf32, #tpu.memory_space<vmem>>, vector<1x32xf32>
    %273 = arith.index_cast %c3_i32_100 : i32 to index
    %c0_102 = arith.constant 0 : index
    %274 = vector.load %arg16[%273, %c0_102] : memref<32x32xf32, #tpu.memory_space<vmem>>, vector<1x32xf32>
    %275 = arith.addf %272, %274 : vector<1x32xf32>
    %276 = arith.index_cast %270 : i32 to index
    %c0_103 = arith.constant 0 : index
    %277 = vector.load %arg17[%276, %c0_103] : memref<16x32xf32, #tpu.memory_space<vmem>>, vector<1x32xf32>
    tpu.vector_store %arg17[%276, %c0_103], %275 {strides = array<i32>} : memref<16x32xf32, #tpu.memory_space<vmem>>, vector<1x32xf32>,
    %c4_i32_104 = arith.constant 4 : i32
    %278 = arith.index_cast %c4_i32_104 : i32 to index
    %279 = memref.load %arg2[%278] : memref<32xi32, #tpu.memory_space<smem>>
    %280 = arith.index_cast %279 : i32 to index
    %c0_105 = arith.constant 0 : index
    %281 = vector.load %arg17[%280, %c0_105] : memref<16x32xf32, #tpu.memory_space<vmem>>, vector<1x32xf32>
    %282 = arith.index_cast %c4_i32_104 : i32 to index
    %c0_106 = arith.constant 0 : index
    %283 = vector.load %arg16[%282, %c0_106] : memref<32x32xf32, #tpu.memory_space<vmem>>, vector<1x32xf32>
    %284 = arith.addf %281, %283 : vector<1x32xf32>
    %285 = arith.index_cast %279 : i32 to index
    %c0_107 = arith.constant 0 : index
    %286 = vector.load %arg17[%285, %c0_107] : memref<16x32xf32, #tpu.memory_space<vmem>>, vector<1x32xf32>
    tpu.vector_store %arg17[%285, %c0_107], %284 {strides = array<i32>} : memref<16x32xf32, #tpu.memory_space<vmem>>, vector<1x32xf32>,
    %c5_i32_108 = arith.constant 5 : i32
    %287 = arith.index_cast %c5_i32_108 : i32 to index
    %288 = memref.load %arg2[%287] : memref<32xi32, #tpu.memory_space<smem>>
    %289 = arith.index_cast %288 : i32 to index
    %c0_109 = arith.constant 0 : index
    %290 = vector.load %arg17[%289, %c0_109] : memref<16x32xf32, #tpu.memory_space<vmem>>, vector<1x32xf32>
    %291 = arith.index_cast %c5_i32_108 : i32 to index
    %c0_110 = arith.constant 0 : index
    %292 = vector.load %arg16[%291, %c0_110] : memref<32x32xf32, #tpu.memory_space<vmem>>, vector<1x32xf32>
    %293 = arith.addf %290, %292 : vector<1x32xf32>
    %294 = arith.index_cast %288 : i32 to index
    %c0_111 = arith.constant 0 : index
    %295 = vector.load %arg17[%294, %c0_111] : memref<16x32xf32, #tpu.memory_space<vmem>>, vector<1x32xf32>
    tpu.vector_store %arg17[%294, %c0_111], %293 {strides = array<i32>} : memref<16x32xf32, #tpu.memory_space<vmem>>, vector<1x32xf32>,
    %c6_i32_112 = arith.constant 6 : i32
    %296 = arith.index_cast %c6_i32_112 : i32 to index
    %297 = memref.load %arg2[%296] : memref<32xi32, #tpu.memory_space<smem>>
    %298 = arith.index_cast %297 : i32 to index
    %c0_113 = arith.constant 0 : index
    %299 = vector.load %arg17[%298, %c0_113] : memref<16x32xf32, #tpu.memory_space<vmem>>, vector<1x32xf32>
    %300 = arith.index_cast %c6_i32_112 : i32 to index
    %c0_114 = arith.constant 0 : index
    %301 = vector.load %arg16[%300, %c0_114] : memref<32x32xf32, #tpu.memory_space<vmem>>, vector<1x32xf32>
    %302 = arith.addf %299, %301 : vector<1x32xf32>
    %303 = arith.index_cast %297 : i32 to index
    %c0_115 = arith.constant 0 : index
    %304 = vector.load %arg17[%303, %c0_115] : memref<16x32xf32, #tpu.memory_space<vmem>>, vector<1x32xf32>
    tpu.vector_store %arg17[%303, %c0_115], %302 {strides = array<i32>} : memref<16x32xf32, #tpu.memory_space<vmem>>, vector<1x32xf32>,
    %c7_i32_116 = arith.constant 7 : i32
    %305 = arith.index_cast %c7_i32_116 : i32 to index
    %306 = memref.load %arg2[%305] : memref<32xi32, #tpu.memory_space<smem>>
    %307 = arith.index_cast %306 : i32 to index
    %c0_117 = arith.constant 0 : index
    %308 = vector.load %arg17[%307, %c0_117] : memref<16x32xf32, #tpu.memory_space<vmem>>, vector<1x32xf32>
    %309 = arith.index_cast %c7_i32_116 : i32 to index
    %c0_118 = arith.constant 0 : index
    %310 = vector.load %arg16[%309, %c0_118] : memref<32x32xf32, #tpu.memory_space<vmem>>, vector<1x32xf32>
    %311 = arith.addf %308, %310 : vector<1x32xf32>
    %312 = arith.index_cast %306 : i32 to index
    %c0_119 = arith.constant 0 : index
    %313 = vector.load %arg17[%312, %c0_119] : memref<16x32xf32, #tpu.memory_space<vmem>>, vector<1x32xf32>
    tpu.vector_store %arg17[%312, %c0_119], %311 {strides = array<i32>} : memref<16x32xf32, #tpu.memory_space<vmem>>, vector<1x32xf32>,
    %c8_i32_120 = arith.constant 8 : i32
    %314 = arith.index_cast %c8_i32_120 : i32 to index
    %315 = memref.load %arg2[%314] : memref<32xi32, #tpu.memory_space<smem>>
    %316 = arith.index_cast %315 : i32 to index
    %c0_121 = arith.constant 0 : index
    %317 = vector.load %arg17[%316, %c0_121] : memref<16x32xf32, #tpu.memory_space<vmem>>, vector<1x32xf32>
    %318 = arith.index_cast %c8_i32_120 : i32 to index
    %c0_122 = arith.constant 0 : index
    %319 = vector.load %arg16[%318, %c0_122] : memref<32x32xf32, #tpu.memory_space<vmem>>, vector<1x32xf32>
    %320 = arith.addf %317, %319 : vector<1x32xf32>
    %321 = arith.index_cast %315 : i32 to index
    %c0_123 = arith.constant 0 : index
    %322 = vector.load %arg17[%321, %c0_123] : memref<16x32xf32, #tpu.memory_space<vmem>>, vector<1x32xf32>
    tpu.vector_store %arg17[%321, %c0_123], %320 {strides = array<i32>} : memref<16x32xf32, #tpu.memory_space<vmem>>, vector<1x32xf32>,
    %c9_i32_124 = arith.constant 9 : i32
    %323 = arith.index_cast %c9_i32_124 : i32 to index
    %324 = memref.load %arg2[%323] : memref<32xi32, #tpu.memory_space<smem>>
    %325 = arith.index_cast %324 : i32 to index
    %c0_125 = arith.constant 0 : index
    %326 = vector.load %arg17[%325, %c0_125] : memref<16x32xf32, #tpu.memory_space<vmem>>, vector<1x32xf32>
    %327 = arith.index_cast %c9_i32_124 : i32 to index
    %c0_126 = arith.constant 0 : index
    %328 = vector.load %arg16[%327, %c0_126] : memref<32x32xf32, #tpu.memory_space<vmem>>, vector<1x32xf32>
    %329 = arith.addf %326, %328 : vector<1x32xf32>
    %330 = arith.index_cast %324 : i32 to index
    %c0_127 = arith.constant 0 : index
    %331 = vector.load %arg17[%330, %c0_127] : memref<16x32xf32, #tpu.memory_space<vmem>>, vector<1x32xf32>
    tpu.vector_store %arg17[%330, %c0_127], %329 {strides = array<i32>} : memref<16x32xf32, #tpu.memory_space<vmem>>, vector<1x32xf32>,
    %c10_i32_128 = arith.constant 10 : i32
    %332 = arith.index_cast %c10_i32_128 : i32 to index
    %333 = memref.load %arg2[%332] : memref<32xi32, #tpu.memory_space<smem>>
    %334 = arith.index_cast %333 : i32 to index
    %c0_129 = arith.constant 0 : index
    %335 = vector.load %arg17[%334, %c0_129] : memref<16x32xf32, #tpu.memory_space<vmem>>, vector<1x32xf32>
    %336 = arith.index_cast %c10_i32_128 : i32 to index
    %c0_130 = arith.constant 0 : index
    %337 = vector.load %arg16[%336, %c0_130] : memref<32x32xf32, #tpu.memory_space<vmem>>, vector<1x32xf32>
    %338 = arith.addf %335, %337 : vector<1x32xf32>
    %339 = arith.index_cast %333 : i32 to index
    %c0_131 = arith.constant 0 : index
    %340 = vector.load %arg17[%339, %c0_131] : memref<16x32xf32, #tpu.memory_space<vmem>>, vector<1x32xf32>
    tpu.vector_store %arg17[%339, %c0_131], %338 {strides = array<i32>} : memref<16x32xf32, #tpu.memory_space<vmem>>, vector<1x32xf32>,
    %c11_i32_132 = arith.constant 11 : i32
    %341 = arith.index_cast %c11_i32_132 : i32 to index
    %342 = memref.load %arg2[%341] : memref<32xi32, #tpu.memory_space<smem>>
    %343 = arith.index_cast %342 : i32 to index
    %c0_133 = arith.constant 0 : index
    %344 = vector.load %arg17[%343, %c0_133] : memref<16x32xf32, #tpu.memory_space<vmem>>, vector<1x32xf32>
    %345 = arith.index_cast %c11_i32_132 : i32 to index
    %c0_134 = arith.constant 0 : index
    %346 = vector.load %arg16[%345, %c0_134] : memref<32x32xf32, #tpu.memory_space<vmem>>, vector<1x32xf32>
    %347 = arith.addf %344, %346 : vector<1x32xf32>
    %348 = arith.index_cast %342 : i32 to index
    %c0_135 = arith.constant 0 : index
    %349 = vector.load %arg17[%348, %c0_135] : memref<16x32xf32, #tpu.memory_space<vmem>>, vector<1x32xf32>
    tpu.vector_store %arg17[%348, %c0_135], %347 {strides = array<i32>} : memref<16x32xf32, #tpu.memory_space<vmem>>, vector<1x32xf32>,
    %c12_i32_136 = arith.constant 12 : i32
    %350 = arith.index_cast %c12_i32_136 : i32 to index
    %351 = memref.load %arg2[%350] : memref<32xi32, #tpu.memory_space<smem>>
    %352 = arith.index_cast %351 : i32 to index
    %c0_137 = arith.constant 0 : index
    %353 = vector.load %arg17[%352, %c0_137] : memref<16x32xf32, #tpu.memory_space<vmem>>, vector<1x32xf32>
    %354 = arith.index_cast %c12_i32_136 : i32 to index
    %c0_138 = arith.constant 0 : index
    %355 = vector.load %arg16[%354, %c0_138] : memref<32x32xf32, #tpu.memory_space<vmem>>, vector<1x32xf32>
    %356 = arith.addf %353, %355 : vector<1x32xf32>
    %357 = arith.index_cast %351 : i32 to index
    %c0_139 = arith.constant 0 : index
    %358 = vector.load %arg17[%357, %c0_139] : memref<16x32xf32, #tpu.memory_space<vmem>>, vector<1x32xf32>
    tpu.vector_store %arg17[%357, %c0_139], %356 {strides = array<i32>} : memref<16x32xf32, #tpu.memory_space<vmem>>, vector<1x32xf32>,
    %c13_i32_140 = arith.constant 13 : i32
    %359 = arith.index_cast %c13_i32_140 : i32 to index
    %360 = memref.load %arg2[%359] : memref<32xi32, #tpu.memory_space<smem>>
    %361 = arith.index_cast %360 : i32 to index
    %c0_141 = arith.constant 0 : index
    %362 = vector.load %arg17[%361, %c0_141] : memref<16x32xf32, #tpu.memory_space<vmem>>, vector<1x32xf32>
    %363 = arith.index_cast %c13_i32_140 : i32 to index
    %c0_142 = arith.constant 0 : index
    %364 = vector.load %arg16[%363, %c0_142] : memref<32x32xf32, #tpu.memory_space<vmem>>, vector<1x32xf32>
    %365 = arith.addf %362, %364 : vector<1x32xf32>
    %366 = arith.index_cast %360 : i32 to index
    %c0_143 = arith.constant 0 : index
    %367 = vector.load %arg17[%366, %c0_143] : memref<16x32xf32, #tpu.memory_space<vmem>>, vector<1x32xf32>
    tpu.vector_store %arg17[%366, %c0_143], %365 {strides = array<i32>} : memref<16x32xf32, #tpu.memory_space<vmem>>, vector<1x32xf32>,
    %c14_i32_144 = arith.constant 14 : i32
    %368 = arith.index_cast %c14_i32_144 : i32 to index
    %369 = memref.load %arg2[%368] : memref<32xi32, #tpu.memory_space<smem>>
    %370 = arith.index_cast %369 : i32 to index
    %c0_145 = arith.constant 0 : index
    %371 = vector.load %arg17[%370, %c0_145] : memref<16x32xf32, #tpu.memory_space<vmem>>, vector<1x32xf32>
    %372 = arith.index_cast %c14_i32_144 : i32 to index
    %c0_146 = arith.constant 0 : index
    %373 = vector.load %arg16[%372, %c0_146] : memref<32x32xf32, #tpu.memory_space<vmem>>, vector<1x32xf32>
    %374 = arith.addf %371, %373 : vector<1x32xf32>
    %375 = arith.index_cast %369 : i32 to index
    %c0_147 = arith.constant 0 : index
    %376 = vector.load %arg17[%375, %c0_147] : memref<16x32xf32, #tpu.memory_space<vmem>>, vector<1x32xf32>
    tpu.vector_store %arg17[%375, %c0_147], %374 {strides = array<i32>} : memref<16x32xf32, #tpu.memory_space<vmem>>, vector<1x32xf32>,
    %c15_i32_148 = arith.constant 15 : i32
    %377 = arith.index_cast %c15_i32_148 : i32 to index
    %378 = memref.load %arg2[%377] : memref<32xi32, #tpu.memory_space<smem>>
    %379 = arith.index_cast %378 : i32 to index
    %c0_149 = arith.constant 0 : index
    %380 = vector.load %arg17[%379, %c0_149] : memref<16x32xf32, #tpu.memory_space<vmem>>, vector<1x32xf32>
    %381 = arith.index_cast %c15_i32_148 : i32 to index
    %c0_150 = arith.constant 0 : index
    %382 = vector.load %arg16[%381, %c0_150] : memref<32x32xf32, #tpu.memory_space<vmem>>, vector<1x32xf32>
    %383 = arith.addf %380, %382 : vector<1x32xf32>
    %384 = arith.index_cast %378 : i32 to index
    %c0_151 = arith.constant 0 : index
    %385 = vector.load %arg17[%384, %c0_151] : memref<16x32xf32, #tpu.memory_space<vmem>>, vector<1x32xf32>
    tpu.vector_store %arg17[%384, %c0_151], %383 {strides = array<i32>} : memref<16x32xf32, #tpu.memory_space<vmem>>, vector<1x32xf32>,
    %c16_i32_152 = arith.constant 16 : i32
    %386 = arith.index_cast %c16_i32_152 : i32 to index
    %387 = memref.load %arg2[%386] : memref<32xi32, #tpu.memory_space<smem>>
    %388 = arith.index_cast %387 : i32 to index
    %c0_153 = arith.constant 0 : index
    %389 = vector.load %arg17[%388, %c0_153] : memref<16x32xf32, #tpu.memory_space<vmem>>, vector<1x32xf32>
    %390 = arith.index_cast %c16_i32_152 : i32 to index
    %c0_154 = arith.constant 0 : index
    %391 = vector.load %arg16[%390, %c0_154] : memref<32x32xf32, #tpu.memory_space<vmem>>, vector<1x32xf32>
    %392 = arith.addf %389, %391 : vector<1x32xf32>
    %393 = arith.index_cast %387 : i32 to index
    %c0_155 = arith.constant 0 : index
    %394 = vector.load %arg17[%393, %c0_155] : memref<16x32xf32, #tpu.memory_space<vmem>>, vector<1x32xf32>
    tpu.vector_store %arg17[%393, %c0_155], %392 {strides = array<i32>} : memref<16x32xf32, #tpu.memory_space<vmem>>, vector<1x32xf32>,
    %c17_i32_156 = arith.constant 17 : i32
    %395 = arith.index_cast %c17_i32_156 : i32 to index
    %396 = memref.load %arg2[%395] : memref<32xi32, #tpu.memory_space<smem>>
    %397 = arith.index_cast %396 : i32 to index
    %c0_157 = arith.constant 0 : index
    %398 = vector.load %arg17[%397, %c0_157] : memref<16x32xf32, #tpu.memory_space<vmem>>, vector<1x32xf32>
    %399 = arith.index_cast %c17_i32_156 : i32 to index
    %c0_158 = arith.constant 0 : index
    %400 = vector.load %arg16[%399, %c0_158] : memref<32x32xf32, #tpu.memory_space<vmem>>, vector<1x32xf32>
    %401 = arith.addf %398, %400 : vector<1x32xf32>
    %402 = arith.index_cast %396 : i32 to index
    %c0_159 = arith.constant 0 : index
    %403 = vector.load %arg17[%402, %c0_159] : memref<16x32xf32, #tpu.memory_space<vmem>>, vector<1x32xf32>
    tpu.vector_store %arg17[%402, %c0_159], %401 {strides = array<i32>} : memref<16x32xf32, #tpu.memory_space<vmem>>, vector<1x32xf32>,
    %c18_i32_160 = arith.constant 18 : i32
    %404 = arith.index_cast %c18_i32_160 : i32 to index
    %405 = memref.load %arg2[%404] : memref<32xi32, #tpu.memory_space<smem>>
    %406 = arith.index_cast %405 : i32 to index
    %c0_161 = arith.constant 0 : index
    %407 = vector.load %arg17[%406, %c0_161] : memref<16x32xf32, #tpu.memory_space<vmem>>, vector<1x32xf32>
    %408 = arith.index_cast %c18_i32_160 : i32 to index
    %c0_162 = arith.constant 0 : index
    %409 = vector.load %arg16[%408, %c0_162] : memref<32x32xf32, #tpu.memory_space<vmem>>, vector<1x32xf32>
    %410 = arith.addf %407, %409 : vector<1x32xf32>
    %411 = arith.index_cast %405 : i32 to index
    %c0_163 = arith.constant 0 : index
    %412 = vector.load %arg17[%411, %c0_163] : memref<16x32xf32, #tpu.memory_space<vmem>>, vector<1x32xf32>
    tpu.vector_store %arg17[%411, %c0_163], %410 {strides = array<i32>} : memref<16x32xf32, #tpu.memory_space<vmem>>, vector<1x32xf32>,
    %c19_i32_164 = arith.constant 19 : i32
    %413 = arith.index_cast %c19_i32_164 : i32 to index
    %414 = memref.load %arg2[%413] : memref<32xi32, #tpu.memory_space<smem>>
    %415 = arith.index_cast %414 : i32 to index
    %c0_165 = arith.constant 0 : index
    %416 = vector.load %arg17[%415, %c0_165] : memref<16x32xf32, #tpu.memory_space<vmem>>, vector<1x32xf32>
    %417 = arith.index_cast %c19_i32_164 : i32 to index
    %c0_166 = arith.constant 0 : index
    %418 = vector.load %arg16[%417, %c0_166] : memref<32x32xf32, #tpu.memory_space<vmem>>, vector<1x32xf32>
    %419 = arith.addf %416, %418 : vector<1x32xf32>
    %420 = arith.index_cast %414 : i32 to index
    %c0_167 = arith.constant 0 : index
    %421 = vector.load %arg17[%420, %c0_167] : memref<16x32xf32, #tpu.memory_space<vmem>>, vector<1x32xf32>
    tpu.vector_store %arg17[%420, %c0_167], %419 {strides = array<i32>} : memref<16x32xf32, #tpu.memory_space<vmem>>, vector<1x32xf32>,
    %c20_i32_168 = arith.constant 20 : i32
    %422 = arith.index_cast %c20_i32_168 : i32 to index
    %423 = memref.load %arg2[%422] : memref<32xi32, #tpu.memory_space<smem>>
    %424 = arith.index_cast %423 : i32 to index
    %c0_169 = arith.constant 0 : index
    %425 = vector.load %arg17[%424, %c0_169] : memref<16x32xf32, #tpu.memory_space<vmem>>, vector<1x32xf32>
    %426 = arith.index_cast %c20_i32_168 : i32 to index
    %c0_170 = arith.constant 0 : index
    %427 = vector.load %arg16[%426, %c0_170] : memref<32x32xf32, #tpu.memory_space<vmem>>, vector<1x32xf32>
    %428 = arith.addf %425, %427 : vector<1x32xf32>
    %429 = arith.index_cast %423 : i32 to index
    %c0_171 = arith.constant 0 : index
    %430 = vector.load %arg17[%429, %c0_171] : memref<16x32xf32, #tpu.memory_space<vmem>>, vector<1x32xf32>
    tpu.vector_store %arg17[%429, %c0_171], %428 {strides = array<i32>} : memref<16x32xf32, #tpu.memory_space<vmem>>, vector<1x32xf32>,
    %c21_i32_172 = arith.constant 21 : i32
    %431 = arith.index_cast %c21_i32_172 : i32 to index
    %432 = memref.load %arg2[%431] : memref<32xi32, #tpu.memory_space<smem>>
    %433 = arith.index_cast %432 : i32 to index
    %c0_173 = arith.constant 0 : index
    %434 = vector.load %arg17[%433, %c0_173] : memref<16x32xf32, #tpu.memory_space<vmem>>, vector<1x32xf32>
    %435 = arith.index_cast %c21_i32_172 : i32 to index
    %c0_174 = arith.constant 0 : index
    %436 = vector.load %arg16[%435, %c0_174] : memref<32x32xf32, #tpu.memory_space<vmem>>, vector<1x32xf32>
    %437 = arith.addf %434, %436 : vector<1x32xf32>
    %438 = arith.index_cast %432 : i32 to index
    %c0_175 = arith.constant 0 : index
    %439 = vector.load %arg17[%438, %c0_175] : memref<16x32xf32, #tpu.memory_space<vmem>>, vector<1x32xf32>
    tpu.vector_store %arg17[%438, %c0_175], %437 {strides = array<i32>} : memref<16x32xf32, #tpu.memory_space<vmem>>, vector<1x32xf32>,
    %c22_i32_176 = arith.constant 22 : i32
    %440 = arith.index_cast %c22_i32_176 : i32 to index
    %441 = memref.load %arg2[%440] : memref<32xi32, #tpu.memory_space<smem>>
    %442 = arith.index_cast %441 : i32 to index
    %c0_177 = arith.constant 0 : index
    %443 = vector.load %arg17[%442, %c0_177] : memref<16x32xf32, #tpu.memory_space<vmem>>, vector<1x32xf32>
    %444 = arith.index_cast %c22_i32_176 : i32 to index
    %c0_178 = arith.constant 0 : index
    %445 = vector.load %arg16[%444, %c0_178] : memref<32x32xf32, #tpu.memory_space<vmem>>, vector<1x32xf32>
    %446 = arith.addf %443, %445 : vector<1x32xf32>
    %447 = arith.index_cast %441 : i32 to index
    %c0_179 = arith.constant 0 : index
    %448 = vector.load %arg17[%447, %c0_179] : memref<16x32xf32, #tpu.memory_space<vmem>>, vector<1x32xf32>
    tpu.vector_store %arg17[%447, %c0_179], %446 {strides = array<i32>} : memref<16x32xf32, #tpu.memory_space<vmem>>, vector<1x32xf32>,
    %c23_i32_180 = arith.constant 23 : i32
    %449 = arith.index_cast %c23_i32_180 : i32 to index
    %450 = memref.load %arg2[%449] : memref<32xi32, #tpu.memory_space<smem>>
    %451 = arith.index_cast %450 : i32 to index
    %c0_181 = arith.constant 0 : index
    %452 = vector.load %arg17[%451, %c0_181] : memref<16x32xf32, #tpu.memory_space<vmem>>, vector<1x32xf32>
    %453 = arith.index_cast %c23_i32_180 : i32 to index
    %c0_182 = arith.constant 0 : index
    %454 = vector.load %arg16[%453, %c0_182] : memref<32x32xf32, #tpu.memory_space<vmem>>, vector<1x32xf32>
    %455 = arith.addf %452, %454 : vector<1x32xf32>
    %456 = arith.index_cast %450 : i32 to index
    %c0_183 = arith.constant 0 : index
    %457 = vector.load %arg17[%456, %c0_183] : memref<16x32xf32, #tpu.memory_space<vmem>>, vector<1x32xf32>
    tpu.vector_store %arg17[%456, %c0_183], %455 {strides = array<i32>} : memref<16x32xf32, #tpu.memory_space<vmem>>, vector<1x32xf32>,
    %c24_i32_184 = arith.constant 24 : i32
    %458 = arith.index_cast %c24_i32_184 : i32 to index
    %459 = memref.load %arg2[%458] : memref<32xi32, #tpu.memory_space<smem>>
    %460 = arith.index_cast %459 : i32 to index
    %c0_185 = arith.constant 0 : index
    %461 = vector.load %arg17[%460, %c0_185] : memref<16x32xf32, #tpu.memory_space<vmem>>, vector<1x32xf32>
    %462 = arith.index_cast %c24_i32_184 : i32 to index
    %c0_186 = arith.constant 0 : index
    %463 = vector.load %arg16[%462, %c0_186] : memref<32x32xf32, #tpu.memory_space<vmem>>, vector<1x32xf32>
    %464 = arith.addf %461, %463 : vector<1x32xf32>
    %465 = arith.index_cast %459 : i32 to index
    %c0_187 = arith.constant 0 : index
    %466 = vector.load %arg17[%465, %c0_187] : memref<16x32xf32, #tpu.memory_space<vmem>>, vector<1x32xf32>
    tpu.vector_store %arg17[%465, %c0_187], %464 {strides = array<i32>} : memref<16x32xf32, #tpu.memory_space<vmem>>, vector<1x32xf32>,
    %c25_i32_188 = arith.constant 25 : i32
    %467 = arith.index_cast %c25_i32_188 : i32 to index
    %468 = memref.load %arg2[%467] : memref<32xi32, #tpu.memory_space<smem>>
    %469 = arith.index_cast %468 : i32 to index
    %c0_189 = arith.constant 0 : index
    %470 = vector.load %arg17[%469, %c0_189] : memref<16x32xf32, #tpu.memory_space<vmem>>, vector<1x32xf32>
    %471 = arith.index_cast %c25_i32_188 : i32 to index
    %c0_190 = arith.constant 0 : index
    %472 = vector.load %arg16[%471, %c0_190] : memref<32x32xf32, #tpu.memory_space<vmem>>, vector<1x32xf32>
    %473 = arith.addf %470, %472 : vector<1x32xf32>
    %474 = arith.index_cast %468 : i32 to index
    %c0_191 = arith.constant 0 : index
    %475 = vector.load %arg17[%474, %c0_191] : memref<16x32xf32, #tpu.memory_space<vmem>>, vector<1x32xf32>
    tpu.vector_store %arg17[%474, %c0_191], %473 {strides = array<i32>} : memref<16x32xf32, #tpu.memory_space<vmem>>, vector<1x32xf32>,
    %c26_i32_192 = arith.constant 26 : i32
    %476 = arith.index_cast %c26_i32_192 : i32 to index
    %477 = memref.load %arg2[%476] : memref<32xi32, #tpu.memory_space<smem>>
    %478 = arith.index_cast %477 : i32 to index
    %c0_193 = arith.constant 0 : index
    %479 = vector.load %arg17[%478, %c0_193] : memref<16x32xf32, #tpu.memory_space<vmem>>, vector<1x32xf32>
    %480 = arith.index_cast %c26_i32_192 : i32 to index
    %c0_194 = arith.constant 0 : index
    %481 = vector.load %arg16[%480, %c0_194] : memref<32x32xf32, #tpu.memory_space<vmem>>, vector<1x32xf32>
    %482 = arith.addf %479, %481 : vector<1x32xf32>
    %483 = arith.index_cast %477 : i32 to index
    %c0_195 = arith.constant 0 : index
    %484 = vector.load %arg17[%483, %c0_195] : memref<16x32xf32, #tpu.memory_space<vmem>>, vector<1x32xf32>
    tpu.vector_store %arg17[%483, %c0_195], %482 {strides = array<i32>} : memref<16x32xf32, #tpu.memory_space<vmem>>, vector<1x32xf32>,
    %c27_i32_196 = arith.constant 27 : i32
    %485 = arith.index_cast %c27_i32_196 : i32 to index
    %486 = memref.load %arg2[%485] : memref<32xi32, #tpu.memory_space<smem>>
    %487 = arith.index_cast %486 : i32 to index
    %c0_197 = arith.constant 0 : index
    %488 = vector.load %arg17[%487, %c0_197] : memref<16x32xf32, #tpu.memory_space<vmem>>, vector<1x32xf32>
    %489 = arith.index_cast %c27_i32_196 : i32 to index
    %c0_198 = arith.constant 0 : index
    %490 = vector.load %arg16[%489, %c0_198] : memref<32x32xf32, #tpu.memory_space<vmem>>, vector<1x32xf32>
    %491 = arith.addf %488, %490 : vector<1x32xf32>
    %492 = arith.index_cast %486 : i32 to index
    %c0_199 = arith.constant 0 : index
    %493 = vector.load %arg17[%492, %c0_199] : memref<16x32xf32, #tpu.memory_space<vmem>>, vector<1x32xf32>
    tpu.vector_store %arg17[%492, %c0_199], %491 {strides = array<i32>} : memref<16x32xf32, #tpu.memory_space<vmem>>, vector<1x32xf32>,
    %c28_i32_200 = arith.constant 28 : i32
    %494 = arith.index_cast %c28_i32_200 : i32 to index
    %495 = memref.load %arg2[%494] : memref<32xi32, #tpu.memory_space<smem>>
    %496 = arith.index_cast %495 : i32 to index
    %c0_201 = arith.constant 0 : index
    %497 = vector.load %arg17[%496, %c0_201] : memref<16x32xf32, #tpu.memory_space<vmem>>, vector<1x32xf32>
    %498 = arith.index_cast %c28_i32_200 : i32 to index
    %c0_202 = arith.constant 0 : index
    %499 = vector.load %arg16[%498, %c0_202] : memref<32x32xf32, #tpu.memory_space<vmem>>, vector<1x32xf32>
    %500 = arith.addf %497, %499 : vector<1x32xf32>
    %501 = arith.index_cast %495 : i32 to index
    %c0_203 = arith.constant 0 : index
    %502 = vector.load %arg17[%501, %c0_203] : memref<16x32xf32, #tpu.memory_space<vmem>>, vector<1x32xf32>
    tpu.vector_store %arg17[%501, %c0_203], %500 {strides = array<i32>} : memref<16x32xf32, #tpu.memory_space<vmem>>, vector<1x32xf32>,
    %c29_i32_204 = arith.constant 29 : i32
    %503 = arith.index_cast %c29_i32_204 : i32 to index
    %504 = memref.load %arg2[%503] : memref<32xi32, #tpu.memory_space<smem>>
    %505 = arith.index_cast %504 : i32 to index
    %c0_205 = arith.constant 0 : index
    %506 = vector.load %arg17[%505, %c0_205] : memref<16x32xf32, #tpu.memory_space<vmem>>, vector<1x32xf32>
    %507 = arith.index_cast %c29_i32_204 : i32 to index
    %c0_206 = arith.constant 0 : index
    %508 = vector.load %arg16[%507, %c0_206] : memref<32x32xf32, #tpu.memory_space<vmem>>, vector<1x32xf32>
    %509 = arith.addf %506, %508 : vector<1x32xf32>
    %510 = arith.index_cast %504 : i32 to index
    %c0_207 = arith.constant 0 : index
    %511 = vector.load %arg17[%510, %c0_207] : memref<16x32xf32, #tpu.memory_space<vmem>>, vector<1x32xf32>
    tpu.vector_store %arg17[%510, %c0_207], %509 {strides = array<i32>} : memref<16x32xf32, #tpu.memory_space<vmem>>, vector<1x32xf32>,
    %c30_i32_208 = arith.constant 30 : i32
    %512 = arith.index_cast %c30_i32_208 : i32 to index
    %513 = memref.load %arg2[%512] : memref<32xi32, #tpu.memory_space<smem>>
    %514 = arith.index_cast %513 : i32 to index
    %c0_209 = arith.constant 0 : index
    %515 = vector.load %arg17[%514, %c0_209] : memref<16x32xf32, #tpu.memory_space<vmem>>, vector<1x32xf32>
    %516 = arith.index_cast %c30_i32_208 : i32 to index
    %c0_210 = arith.constant 0 : index
    %517 = vector.load %arg16[%516, %c0_210] : memref<32x32xf32, #tpu.memory_space<vmem>>, vector<1x32xf32>
    %518 = arith.addf %515, %517 : vector<1x32xf32>
    %519 = arith.index_cast %513 : i32 to index
    %c0_211 = arith.constant 0 : index
    %520 = vector.load %arg17[%519, %c0_211] : memref<16x32xf32, #tpu.memory_space<vmem>>, vector<1x32xf32>
    tpu.vector_store %arg17[%519, %c0_211], %518 {strides = array<i32>} : memref<16x32xf32, #tpu.memory_space<vmem>>, vector<1x32xf32>,
    %c31_i32_212 = arith.constant 31 : i32
    %521 = arith.index_cast %c31_i32_212 : i32 to index
    %522 = memref.load %arg2[%521] : memref<32xi32, #tpu.memory_space<smem>>
    %523 = arith.index_cast %522 : i32 to index
    %c0_213 = arith.constant 0 : index
    %524 = vector.load %arg17[%523, %c0_213] : memref<16x32xf32, #tpu.memory_space<vmem>>, vector<1x32xf32>
    %525 = arith.index_cast %c31_i32_212 : i32 to index
    %c0_214 = arith.constant 0 : index
    %526 = vector.load %arg16[%525, %c0_214] : memref<32x32xf32, #tpu.memory_space<vmem>>, vector<1x32xf32>
    %527 = arith.addf %524, %526 : vector<1x32xf32>
    %528 = arith.index_cast %522 : i32 to index
    %c0_215 = arith.constant 0 : index
    %529 = vector.load %arg17[%528, %c0_215] : memref<16x32xf32, #tpu.memory_space<vmem>>, vector<1x32xf32>
    tpu.vector_store %arg17[%528, %c0_215], %527 {strides = array<i32>} : memref<16x32xf32, #tpu.memory_space<vmem>>, vector<1x32xf32>,
    %c32_i32_216 = arith.constant 32 : i32
    %c0_217 = arith.constant 0 : index
    %c0_218 = arith.constant 0 : index
    %530 = vector.load %arg14[%c0_217, %c0_218] : memref<16x32xf32, #tpu.memory_space<vmem>>, vector<16x32xf32>
    %c0_219 = arith.constant 0 : index
    %c0_220 = arith.constant 0 : index
    %531 = vector.load %arg10[%c0_219, %c0_220] : memref<32x32xf32, #tpu.memory_space<vmem>>, vector<32x32xf32>
    %cst_221 = arith.constant dense<0.000000e+00> : vector<16x32xf32>
    %532 = tpu.matmul %530, %531, %cst_221 {dimension_numbers = #tpu.dot_dimension_numbers<[1], [0], [0], [1], [0, 0, 1, 1], [], []>} : vector<16x32xf32>, vector<32x32xf32>, vector<16x32xf32> -> vector<16x32xf32>
    %c0_222 = arith.constant 0 : index
    %c0_223 = arith.constant 0 : index
    %533 = vector.load %arg17[%c0_222, %c0_223] : memref<16x32xf32, #tpu.memory_space<vmem>>, vector<16x32xf32>
    %534 = arith.addf %532, %533 : vector<16x32xf32>
    %c0_224 = arith.constant 0 : index
    %c0_225 = arith.constant 0 : index
    %535 = vector.load %arg11[%c0_224, %c0_225] : memref<1x32xf32, #tpu.memory_space<vmem>>, vector<1x32xf32>
    %536 = vector.broadcast %535 : vector<1x32xf32> to vector<16x32xf32>
    %537 = arith.addf %534, %536 : vector<16x32xf32>
    %cst_226 = arith.constant 0.000000e+00 : f32
    %538 = vector.broadcast %cst_226 : f32 to vector<16x32xf32>
    %539 = arith.maximumf %537, %538 : vector<16x32xf32>
    %c0_227 = arith.constant 0 : index
    %c0_228 = arith.constant 0 : index
    %540 = vector.load %arg12[%c0_227, %c0_228] : memref<16x32xf32, #tpu.memory_space<vmem>>, vector<16x32xf32>
    tpu.vector_store %arg12[%c0_227, %c0_228], %539 {strides = array<i32>} : memref<16x32xf32, #tpu.memory_space<vmem>>, vector<16x32xf32>,
    %541 = tpu.iota {dimensions = array<i32: 0>} : vector<2x16xi32>
    %c0_229 = arith.constant 0 : index
    %c0_230 = arith.constant 0 : index
    %542 = vector.load %arg5[%c0_229, %c0_230] : memref<1x16xi32, #tpu.memory_space<vmem>>, vector<1x16xi32>
    %543 = vector.broadcast %542 : vector<1x16xi32> to vector<2x16xi32>
    %544 = arith.cmpi eq, %541, %543 : vector<2x16xi32>
    %545 = arith.extui %544 : vector<2x16xi1> to vector<2x16xi32>
    %546 = arith.sitofp %545 : vector<2x16xi32> to vector<2x16xf32>
    %cst_231 = arith.constant dense<0.000000e+00> : vector<2x32xf32>
    %547 = tpu.matmul %546, %539, %cst_231 {dimension_numbers = #tpu.dot_dimension_numbers<[1], [0], [0], [1], [0, 0, 1, 1], [], []>} : vector<2x16xf32>, vector<16x32xf32>, vector<2x32xf32> -> vector<2x32xf32>
    %cst_232 = arith.constant dense<0.000000e+00> : vector<2xf32>
    %548 = vector.multi_reduction <add>, %546, %cst_232 [1] : vector<2x16xf32> to vector<2xf32>
    %549 = vector.shape_cast %548 : vector<2xf32> to vector<2x1xf32>
    %cst_233 = arith.constant 1.000000e+00 : f32
    %550 = vector.broadcast %cst_233 : f32 to vector<2x1xf32>
    %551 = arith.maximumf %549, %550 : vector<2x1xf32>
    %552 = tpu.reciprocal %551 {approx = true} : vector<2x1xf32> -> vector<2x1xf32>
    %553 = vector.broadcast %552 : vector<2x1xf32> to vector<2x32xf32>
    %554 = arith.mulf %547, %553 : vector<2x32xf32>
    %c0_234 = arith.constant 0 : index
    %c0_235 = arith.constant 0 : index
    %555 = vector.load %arg13[%c0_234, %c0_235] : memref<2x32xf32, #tpu.memory_space<vmem>>, vector<2x32xf32>
    tpu.vector_store %arg13[%c0_234, %c0_235], %554 {strides = array<i32>} : memref<2x32xf32, #tpu.memory_space<vmem>>, vector<2x32xf32>,
    return
  }
  func.func @transform_0(%arg0: i32, %arg1: memref<32xi32, #tpu.memory_space<smem>>, %arg2: memref<32xi32, #tpu.memory_space<smem>>) -> (i32, i32) {
    %c0_i32 = arith.constant 0 : i32
    %c0_i32_0 = arith.constant 0 : i32
    %c0_i32_1 = arith.constant 0 : i32
    return %c0_i32, %c0_i32_0 : i32, i32
  }
  func.func @transform_1(%arg0: i32, %arg1: memref<32xi32, #tpu.memory_space<smem>>, %arg2: memref<32xi32, #tpu.memory_space<smem>>) -> (i32, i32) {
    %c0_i32 = arith.constant 0 : i32
    %c0_i32_0 = arith.constant 0 : i32
    %c0_i32_1 = arith.constant 0 : i32
    return %c0_i32, %c0_i32_0 : i32, i32
  }
  func.func @transform_2(%arg0: i32, %arg1: memref<32xi32, #tpu.memory_space<smem>>, %arg2: memref<32xi32, #tpu.memory_space<smem>>) -> (i32, i32) {
    %c0_i32 = arith.constant 0 : i32
    %c0_i32_0 = arith.constant 0 : i32
    %c0_i32_1 = arith.constant 0 : i32
    return %c0_i32, %c0_i32_0 : i32, i32
  }
  func.func @transform_3(%arg0: i32, %arg1: memref<32xi32, #tpu.memory_space<smem>>, %arg2: memref<32xi32, #tpu.memory_space<smem>>) -> (i32, i32) {
    %c0_i32 = arith.constant 0 : i32
    %c0_i32_0 = arith.constant 0 : i32
    %c0_i32_1 = arith.constant 0 : i32
    return %c0_i32, %c0_i32_0 : i32, i32
  }
  func.func @transform_4(%arg0: i32, %arg1: memref<32xi32, #tpu.memory_space<smem>>, %arg2: memref<32xi32, #tpu.memory_space<smem>>) -> (i32, i32) {
    %c0_i32 = arith.constant 0 : i32
    %c0_i32_0 = arith.constant 0 : i32
    %c0_i32_1 = arith.constant 0 : i32
    return %c0_i32, %c0_i32_0 : i32, i32
  }
  func.func @transform_5(%arg0: i32, %arg1: memref<32xi32, #tpu.memory_space<smem>>, %arg2: memref<32xi32, #tpu.memory_space<smem>>) -> (i32, i32) {
    %c0_i32 = arith.constant 0 : i32
    %c0_i32_0 = arith.constant 0 : i32
    %c0_i32_1 = arith.constant 0 : i32
    return %c0_i32, %c0_i32_0 : i32, i32
  }
  func.func @transform_6(%arg0: i32, %arg1: memref<32xi32, #tpu.memory_space<smem>>, %arg2: memref<32xi32, #tpu.memory_space<smem>>) -> (i32, i32) {
    %c0_i32 = arith.constant 0 : i32
    %c0_i32_0 = arith.constant 0 : i32
    %c0_i32_1 = arith.constant 0 : i32
    return %c0_i32, %c0_i32_0 : i32, i32
  }
  func.func @transform_7(%arg0: i32, %arg1: memref<32xi32, #tpu.memory_space<smem>>, %arg2: memref<32xi32, #tpu.memory_space<smem>>) -> (i32, i32) {
    %c0_i32 = arith.constant 0 : i32
    %c0_i32_0 = arith.constant 0 : i32
    %c0_i32_1 = arith.constant 0 : i32
    return %c0_i32, %c0_i32_0 : i32, i32
  }
  func.func @transform_8(%arg0: i32, %arg1: memref<32xi32, #tpu.memory_space<smem>>, %arg2: memref<32xi32, #tpu.memory_space<smem>>) -> (i32, i32) {
    %c0_i32 = arith.constant 0 : i32
    %c0_i32_0 = arith.constant 0 : i32
    %c0_i32_1 = arith.constant 0 : i32
    return %c0_i32, %c0_i32_0 : i32, i32
  }
  func.func @transform_9(%arg0: i32, %arg1: memref<32xi32, #tpu.memory_space<smem>>, %arg2: memref<32xi32, #tpu.memory_space<smem>>) -> (i32, i32) {
    %c0_i32 = arith.constant 0 : i32
    %c0_i32_0 = arith.constant 0 : i32
    %c0_i32_1 = arith.constant 0 : i32
    return %c0_i32, %c0_i32_0 : i32, i32
  }
  func.func @transform_10(%arg0: i32, %arg1: memref<32xi32, #tpu.memory_space<smem>>, %arg2: memref<32xi32, #tpu.memory_space<smem>>) -> (i32, i32) {
    %c0_i32 = arith.constant 0 : i32
    %c0_i32_0 = arith.constant 0 : i32
    %c0_i32_1 = arith.constant 0 : i32
    return %c0_i32, %c0_i32_0 : i32, i32
  }
}

</mosaic_0001>

<llo_original>
// kernel: encoder_forward.1
$region0: #{encoder_forward.1}
  #allocation0 [shape = 'u32[]', space=smem, size = 0x4, offset = 0x4, fixed_abs, tag = 'smem constant byte address 0x4 - core index']
  #allocation1 [shape = 'u32[144,128]{1,0:T(1,128)}', space=vmem, size = 0x12000, scoped, tag = 'internal scratch']
  #allocation2 [shape = 'f32[16,32]{1,0:T(8,128)}', space=vmem, size = 0x2000, scoped, tag = 'scratch operand']
  #allocation3 [shape = 'f32[32,32]{1,0:T(8,128)}', space=vmem, size = 0x4000, scoped, tag = 'scratch operand']
  #allocation4 [shape = 'f32[32,32]{1,0:T(8,128)}', space=vmem, size = 0x4000, scoped, tag = 'scratch operand']
  #allocation5 [shape = 'f32[16,32]{1,0:T(8,128)}', space=vmem, size = 0x2000, scoped, tag = 'scratch operand']
  #allocation6 [shape = 's32[1]{0}', space=sflag, size = 0x4, scoped, tag = 'scoped memory for encoder_forward.1']
  #allocation7 [shape = 'u8[512]{0}', space=smem, size = 0x200, scoped, tag = 'prefetched SMEM operand 0']
  #allocation8 [shape = 'u8[512]{0}', space=smem, size = 0x200, scoped, tag = 'prefetched SMEM operand 1']
  %s0 = inlined_call_operand.vmem [shape: s32[32], index: 0, kind: input, shape index: {}]
  %s1 = inlined_call_operand.vmem [shape: s32[32], index: 1, kind: input, shape index: {}]
  %s2 = inlined_call_operand.vmem [shape: s32[16,4], index: 2, kind: input, shape index: {}]
  %s3 = inlined_call_operand.vmem [shape: s32[32,1], index: 3, kind: input, shape index: {}]
  %s4 = inlined_call_operand.vmem [shape: s32[1,16], index: 4, kind: input, shape index: {}]
  %s5 = inlined_call_operand.vmem [shape: f32[32,32], index: 5, kind: input, shape index: {}]
  %s6 = inlined_call_operand.vmem [shape: f32[8,32], index: 6, kind: input, shape index: {}]
  %s7 = inlined_call_operand.vmem [shape: f32[32,32], index: 7, kind: input, shape index: {}]
  %s8 = inlined_call_operand.vmem [shape: f32[1,32], index: 8, kind: input, shape index: {}]
  %s9 = inlined_call_operand.vmem [shape: f32[32,32], index: 9, kind: input, shape index: {}]
  %s10 = inlined_call_operand.vmem [shape: f32[1,32], index: 10, kind: input, shape index: {}]
  %s11 = inlined_call_operand.hbm [shape: f32[16,32], index: 11, kind: output, shape index: {0}]
  %s12 = inlined_call_operand.hbm [shape: f32[2,32], index: 12, kind: output, shape index: {1}]
  %13 = xla_tuple %s11, %s12
  %s14 = sld [smem:[#allocation0]]
  $region54: #{encoder_forward.1} parent=0
    _
  %s16 = ssub.s32 1, %s14
  %s17 = scalar_select 0, %s16, %s14
  %s18 = sshll.u32 %s0, 4
  %s19 = int_to_ptr.vmem [resolvable:$true] %s18
  %21 = dma.vmem_to_smem %s19, 16, [#allocation7], [#allocation6]
  %s22 = sshll.u32 %s1, 4
  %s23 = int_to_ptr.vmem [resolvable:$true] %s22
  %25 = dma.vmem_to_smem %s23, 16, [#allocation8], [#allocation6]
  %26 = dma.done [#allocation6], 32
  %27 = sfence
  $region1: #{encoder_forward.1} parent=0
    #allocation9 [shape = 'u8[8192]{0}', space=vmem, size = 0x2000, scoped, tag = 'output window, operand 0, single buffered']
    #allocation10 [shape = 's32[1]{0}', space=sflag, size = 0x4, scoped, tag = 'scoped memory for encoder_forward.1']
    #allocation11 [shape = 'u8[1024]{0}', space=vmem, size = 0x400, scoped, tag = 'output window, operand 1, single buffered']
    #allocation12 [shape = 's32[1]{0}', space=sflag, size = 0x4, scoped, tag = 'scoped memory for encoder_forward.1']
    %28 = vsyncpa [#allocation10], 0
    %29 = vsyncpa [#allocation12], 0
    // Predicated region
    $region2: #{encoder_forward.1} parent=1 // pred_check
      _
    $region3: #{encoder_forward.1} parent=1 // pred_check_branch
      %31 = sbr.rel (0) target = $region5
    $region4: #{encoder_forward.1} parent=1 // pred_region
      _
    $region5: #{encoder_forward.1} parent=1 // pred_fallthru
      _
    // Predicated region
    $region6: #{encoder_forward.1} parent=1 // pred_check
      _
    $region7: #{encoder_forward.1} parent=1 // pred_check_branch
      %33 = sbr.rel (0) target = $region9
    $region8: #{encoder_forward.1} parent=1 // pred_region
      _
    $region9: #{encoder_forward.1} parent=1 // pred_fallthru
      _
    // Predicated region
    $region10: #{encoder_forward.1} parent=1 // pred_check
      _
    $region11: #{encoder_forward.1} parent=1 // pred_check_branch
      %35 = sbr.rel (0) target = $region13
    $region12: #{encoder_forward.1} parent=1 // pred_region
      _
    $region13: #{encoder_forward.1} parent=1 // pred_fallthru
      _
    // Predicated region
    $region14: #{encoder_forward.1} parent=1 // pred_check
      _
    $region15: #{encoder_forward.1} parent=1 // pred_check_branch
      %37 = sbr.rel (0) target = $region17
    $region16: #{encoder_forward.1} parent=1 // pred_region
      _
    $region17: #{encoder_forward.1} parent=1 // pred_fallthru
      _
    // Predicated region
    $region18: #{encoder_forward.1} parent=1 // pred_check
      _
    $region19: #{encoder_forward.1} parent=1 // pred_check_branch
      %39 = sbr.rel (0) target = $region21
    $region20: #{encoder_forward.1} parent=1 // pred_region
      _
    $region21: #{encoder_forward.1} parent=1 // pred_fallthru
      _
    // Predicated region
    $region22: #{encoder_forward.1} parent=1 // pred_check
      _
    $region23: #{encoder_forward.1} parent=1 // pred_check_branch
      %41 = sbr.rel (0) target = $region25
    $region24: #{encoder_forward.1} parent=1 // pred_region
      _
    $region25: #{encoder_forward.1} parent=1 // pred_fallthru
      _
    // Predicated region
    $region26: #{encoder_forward.1} parent=1 // pred_check
      _
    $region27: #{encoder_forward.1} parent=1 // pred_check_branch
      %43 = sbr.rel (0) target = $region29
    $region28: #{encoder_forward.1} parent=1 // pred_region
      _
    $region29: #{encoder_forward.1} parent=1 // pred_fallthru
      _
    // Predicated region
    $region30: #{encoder_forward.1} parent=1 // pred_check
      _
    $region31: #{encoder_forward.1} parent=1 // pred_check_branch
      %45 = sbr.rel (0) target = $region33
    $region32: #{encoder_forward.1} parent=1 // pred_region
      _
    $region33: #{encoder_forward.1} parent=1 // pred_fallthru
      _
    // Predicated region
    $region34: #{encoder_forward.1} parent=1 // pred_check
      _
    $region35: #{encoder_forward.1} parent=1 // pred_check_branch
      %47 = sbr.rel (0) target = $region37
    $region36: #{encoder_forward.1} parent=1 // pred_region
      _
    $region37: #{encoder_forward.1} parent=1 // pred_fallthru
      _
    %v48 = vld [vmem:[%s2] sm:$0xff]
    %v49 = vld [vmem:[%s2 + $0x8] sm:$0xff]
    %v50 = vlaneseq
    %v51 = vand.u32 %v50, 127
    %52 = vset.pattern.permute.xlu0 0
    %53 = vperm.xlu0 %52, %v48
    %v54 = vpop.permute.xlu0 %53
    %55 = vset.pattern.permute.xlu0 0
    %56 = vperm.xlu0 %55, %v49
    %v57 = vpop.permute.xlu0 %56
    %vm58 = vcmp.eq.s32.totalorder %v51, %v54
    %vm59 = vcmp.eq.s32.totalorder %v51, %v57
    %v60 = vsel %vm58, 1, 0
    %v61 = vsel %vm59, 1, 0
    %v62 = vcvt.s32.f32 %v60
    %v63 = vcvt.s32.f32 %v61
    %v64 = vadd.f32 %v62, 0.0
    %v65 = vadd.f32 %v63, 0.0
    %66 = vset.pattern.permute.xlu0 1
    %67 = vperm.xlu0 %66, %v48
    %v68 = vpop.permute.xlu0 %67
    %69 = vset.pattern.permute.xlu0 1
    %70 = vperm.xlu0 %69, %v49
    %v71 = vpop.permute.xlu0 %70
    %vm72 = vcmp.eq.s32.totalorder %v51, %v68
    %vm73 = vcmp.eq.s32.totalorder %v51, %v71
    %v74 = vsel %vm72, 1, 0
    %v75 = vsel %vm73, 1, 0
    %v76 = vcvt.s32.f32 %v74
    %v77 = vcvt.s32.f32 %v75
    %v78 = vadd.f32 %v64, %v76
    %v79 = vadd.f32 %v65, %v77
    %80 = vset.pattern.permute.xlu0 2
    %81 = vperm.xlu0 %80, %v48
    %v82 = vpop.permute.xlu0 %81
    %83 = vset.pattern.permute.xlu0 2
    %84 = vperm.xlu0 %83, %v49
    %v85 = vpop.permute.xlu0 %84
    %vm86 = vcmp.eq.s32.totalorder %v51, %v82
    %vm87 = vcmp.eq.s32.totalorder %v51, %v85
    %v88 = vsel %vm86, 1, 0
    %v89 = vsel %vm87, 1, 0
    %v90 = vcvt.s32.f32 %v88
    %v91 = vcvt.s32.f32 %v89
    %v92 = vadd.f32 %v78, %v90
    %v93 = vadd.f32 %v79, %v91
    %94 = vset.pattern.permute.xlu0 3
    %95 = vperm.xlu0 %94, %v48
    %v96 = vpop.permute.xlu0 %95
    %97 = vset.pattern.permute.xlu0 3
    %98 = vperm.xlu0 %97, %v49
    %v99 = vpop.permute.xlu0 %98
    %vm100 = vcmp.eq.s32.totalorder %v51, %v96
    %vm101 = vcmp.eq.s32.totalorder %v51, %v99
    %v102 = vsel %vm100, 1, 0
    %v103 = vsel %vm101, 1, 0
    %v104 = vcvt.s32.f32 %v102
    %v105 = vcvt.s32.f32 %v103
    %v106 = vadd.f32 %v92, %v104
    %v107 = vadd.f32 %v93, %v105
    %v108 = vld [vmem:[%s5] sm:$0xff]
    %v109 = vld [vmem:[%s5 + $0x8] sm:$0xff]
    %v110 = vld [vmem:[%s5 + $0x10] sm:$0xff]
    %v111 = vld [vmem:[%s5 + $0x18] sm:$0xff]
    %vm112 = vcmask 261120
    %v114 = vsel %vm112, %v106, 0
    %v117 = vsel %vm112, %v107, 0
    %119 = vmatprep.subr.mxu0 0.0
    %120 = vmatpush1.msra.mxu0 %v108
    %121 = vmatprep.subr.mxu0 0.0
    %122 = vmatpush1.msra.mxu0 %v109
    %123 = vmatprep.subr.mxu0 0.0
    %124 = vmatpush1.msra.mxu0 %v110
    %125 = vmatprep.subr.mxu0 0.0
    %126 = vmatpush1.msra.mxu0 %v111
    %127 = vmatprep.subr.mxu0 0.0
    %128 = vmatpush1.msra.mxu0 0.0
    %129 = vmatprep.subr.mxu0 0.0
    %130 = vmatpush1.msra.mxu0 0.0
    %131 = vmatprep.subr.mxu0 0.0
    %132 = vmatpush1.msra.mxu0 0.0
    %133 = vmatprep.subr.mxu0 0.0
    %134 = vmatpush1.msra.mxu0 0.0
    %135 = vmatprep.subr.mxu0 0.0
    %136 = vmatpush1.msra.mxu0 0.0
    %137 = vmatprep.subr.mxu0 0.0
    %138 = vmatpush1.msra.mxu0 0.0
    %139 = vmatprep.subr.mxu0 0.0
    %140 = vmatpush1.msra.mxu0 0.0
    %141 = vmatprep.subr.mxu0 0.0
    %142 = vmatpush1.msra.mxu0 0.0
    %143 = vmatprep.subr.mxu0 0.0
    %144 = vmatpush1.msra.mxu0 0.0
    %145 = vmatprep.subr.mxu0 0.0
    %146 = vmatpush1.msra.mxu0 0.0
    %147 = vmatprep.subr.mxu0 0.0
    %148 = vmatpush1.msra.mxu0 0.0
    %149 = vmatprep.subr.mxu0 0.0
    %150 = vmatpush1.msra.mxu0 0.0
    %151 = vmatprep.subr.mxu0 0.0
    %152 = vmatpush1.msra.mxu0 0.0
    %153 = vmatprep.subr.mxu0 0.0
    %154 = vmatpush1.msra.mxu0 0.0
    %155 = vmatprep.subr.mxu0 0.0
    %156 = vmatpush1.msra.mxu0 0.0
    %157 = vmatprep.subr.mxu0 0.0
    %158 = vmatpush1.msra.mxu0 0.0
    %159 = vmatprep.subr.mxu0 0.0
    %160 = vmatpush1.msra.mxu0 0.0
    %161 = vmatprep.subr.mxu0 0.0
    %162 = vmatpush1.msra.mxu0 0.0
    %163 = vmatprep.subr.mxu0 0.0
    %164 = vmatpush1.msra.mxu0 0.0
    %165 = vmatprep.subr.mxu0 0.0
    %166 = vmatpush1.msra.mxu0 0.0
    %167 = vmatprep.subr.mxu0 0.0
    %168 = vmatpush1.msra.mxu0 0.0
    %169 = vmatprep.subr.mxu0 0.0
    %170 = vmatpush1.msra.mxu0 0.0
    %171 = vmatprep.subr.mxu0 0.0
    %172 = vmatpush1.msra.mxu0 0.0
    %173 = vmatprep.subr.mxu0 0.0
    %174 = vmatpush1.msra.mxu0 0.0
    %175 = vmatprep.subr.mxu0 0.0
    %176 = vmatpush1.msra.mxu0 0.0
    %177 = vmatprep.subr.mxu0 0.0
    %178 = vmatpush1.msra.mxu0 0.0
    %179 = vmatprep.subr.mxu0 0.0
    %180 = vmatpush1.msra.mxu0 0.0
    %181 = vmatprep.subr.mxu0 0.0
    %182 = vmatpush1.msra.mxu0 0.0
    %183 = vmatprep.mubr.f32.mxu0 0.0
    %184 = vmatmul.mubr.f32.gmra.mrb[0].mxu0 %v114
    %v185 = vpop.f32.mrb[0].mxu0
    %v186 = vadd.f32 0.0, %v185
    %v187 = vpop.f32.mrb[0].mxu0
    %188 = vmatprep.mubr.f32.mxu0 0.0
    %189 = vmatmul.mubr.f32.gmra.mrb[0].mxu0 %v117
    %v190 = vpop.f32.mrb[0].mxu0
    %v191 = vadd.f32 0.0, %v190
    %v192 = vpop.f32.mrb[0].mxu0
    %193 = vdwg.mxu0
    %194 = vst.msk [vmem:[#allocation2] sm:$0xff] %vm112, %v186
    %195 = vst.msk [vmem:[#allocation2 + $0x8] sm:$0xff] %vm112, %v191
    %v196 = vld [vmem:[%s3] sm:$0xff]
    %v197 = vld [vmem:[%s3 + $0x8] sm:$0xff]
    %v198 = vld [vmem:[%s3 + $0x10] sm:$0xff]
    %v199 = vld [vmem:[%s3 + $0x18] sm:$0xff]
    %200 = vset.pattern.permute.xlu0 0
    %201 = vperm.xlu0 %200, %v196
    %v202 = vpop.permute.xlu0 %201
    %203 = vset.pattern.permute.xlu0 0
    %204 = vperm.xlu0 %203, %v197
    %v205 = vpop.permute.xlu0 %204
    %206 = vset.pattern.permute.xlu0 0
    %207 = vperm.xlu0 %206, %v198
    %v208 = vpop.permute.xlu0 %207
    %209 = vset.pattern.permute.xlu0 0
    %210 = vperm.xlu0 %209, %v199
    %v211 = vpop.permute.xlu0 %210
    %vm212 = vcmp.eq.s32.totalorder %v51, %v202
    %vm213 = vcmp.eq.s32.totalorder %v51, %v205
    %vm214 = vcmp.eq.s32.totalorder %v51, %v208
    %vm215 = vcmp.eq.s32.totalorder %v51, %v211
    %v216 = vsel %vm212, 1, 0
    %v217 = vsel %vm213, 1, 0
    %v218 = vsel %vm214, 1, 0
    %v219 = vsel %vm215, 1, 0
    %v220 = vcvt.s32.f32 %v216
    %v221 = vcvt.s32.f32 %v217
    %v222 = vcvt.s32.f32 %v218
    %v223 = vcvt.s32.f32 %v219
    %v224 = vld [vmem:[%s6] sm:$0xff]
    %vm225 = vcmask 64512
    %v227 = vsel %vm225, %v220, 0
    %v230 = vsel %vm225, %v221, 0
    %v233 = vsel %vm225, %v222, 0
    %v236 = vsel %vm225, %v223, 0
    %238 = vmatprep.subr.mxu0 0.0
    %239 = vmatpush1.msra.mxu0 %v224
    %240 = vmatprep.subr.mxu0 0.0
    %241 = vmatpush1.msra.mxu0 0.0
    %242 = vmatprep.subr.mxu0 0.0
    %243 = vmatpush1.msra.mxu0 0.0
    %244 = vmatprep.subr.mxu0 0.0
    %245 = vmatpush1.msra.mxu0 0.0
    %246 = vmatprep.subr.mxu0 0.0
    %247 = vmatpush1.msra.mxu0 0.0
    %248 = vmatprep.subr.mxu0 0.0
    %249 = vmatpush1.msra.mxu0 0.0
    %250 = vmatprep.subr.mxu0 0.0
    %251 = vmatpush1.msra.mxu0 0.0
    %252 = vmatprep.subr.mxu0 0.0
    %253 = vmatpush1.msra.mxu0 0.0
    %254 = vmatprep.subr.mxu0 0.0
    %255 = vmatpush1.msra.mxu0 0.0
    %256 = vmatprep.subr.mxu0 0.0
    %257 = vmatpush1.msra.mxu0 0.0
    %258 = vmatprep.subr.mxu0 0.0
    %259 = vmatpush1.msra.mxu0 0.0
    %260 = vmatprep.subr.mxu0 0.0
    %261 = vmatpush1.msra.mxu0 0.0
    %262 = vmatprep.subr.mxu0 0.0
    %263 = vmatpush1.msra.mxu0 0.0
    %264 = vmatprep.subr.mxu0 0.0
    %265 = vmatpush1.msra.mxu0 0.0
    %266 = vmatprep.subr.mxu0 0.0
    %267 = vmatpush1.msra.mxu0 0.0
    %268 = vmatprep.subr.mxu0 0.0
    %269 = vmatpush1.msra.mxu0 0.0
    %270 = vmatprep.subr.mxu0 0.0
    %271 = vmatpush1.msra.mxu0 0.0
    %272 = vmatprep.subr.mxu0 0.0
    %273 = vmatpush1.msra.mxu0 0.0
    %274 = vmatprep.subr.mxu0 0.0
    %275 = vmatpush1.msra.mxu0 0.0
    %276 = vmatprep.subr.mxu0 0.0
    %277 = vmatpush1.msra.mxu0 0.0
    %278 = vmatprep.subr.mxu0 0.0
    %279 = vmatpush1.msra.mxu0 0.0
    %280 = vmatprep.subr.mxu0 0.0
    %281 = vmatpush1.msra.mxu0 0.0
    %282 = vmatprep.subr.mxu0 0.0
    %283 = vmatpush1.msra.mxu0 0.0
    %284 = vmatprep.subr.mxu0 0.0
    %285 = vmatpush1.msra.mxu0 0.0
    %286 = vmatprep.subr.mxu0 0.0
    %287 = vmatpush1.msra.mxu0 0.0
    %288 = vmatprep.subr.mxu0 0.0
    %289 = vmatpush1.msra.mxu0 0.0
    %290 = vmatprep.subr.mxu0 0.0
    %291 = vmatpush1.msra.mxu0 0.0
    %292 = vmatprep.subr.mxu0 0.0
    %293 = vmatpush1.msra.mxu0 0.0
    %294 = vmatprep.subr.mxu0 0.0
    %295 = vmatpush1.msra.mxu0 0.0
    %296 = vmatprep.subr.mxu0 0.0
    %297 = vmatpush1.msra.mxu0 0.0
    %298 = vmatprep.subr.mxu0 0.0
    %299 = vmatpush1.msra.mxu0 0.0
    %300 = vmatprep.subr.mxu0 0.0
    %301 = vmatpush1.msra.mxu0 0.0
    %302 = vmatprep.mubr.f32.mxu0 0.0
    %303 = vmatmul.mubr.f32.gmra.mrb[0].mxu0 %v227
    %v304 = vpop.f32.mrb[0].mxu0
    %v305 = vadd.f32 0.0, %v304
    %v306 = vpop.f32.mrb[0].mxu0
    %307 = vmatprep.mubr.f32.mxu0 0.0
    %308 = vmatmul.mubr.f32.gmra.mrb[0].mxu0 %v230
    %v309 = vpop.f32.mrb[0].mxu0
    %v310 = vadd.f32 0.0, %v309
    %v311 = vpop.f32.mrb[0].mxu0
    %312 = vmatprep.mubr.f32.mxu0 0.0
    %313 = vmatmul.mubr.f32.gmra.mrb[0].mxu0 %v233
    %v314 = vpop.f32.mrb[0].mxu0
    %v315 = vadd.f32 0.0, %v314
    %v316 = vpop.f32.mrb[0].mxu0
    %317 = vmatprep.mubr.f32.mxu0 0.0
    %318 = vmatmul.mubr.f32.gmra.mrb[0].mxu0 %v236
    %v319 = vpop.f32.mrb[0].mxu0
    %v320 = vadd.f32 0.0, %v319
    %v321 = vpop.f32.mrb[0].mxu0
    %322 = vdwg.mxu0
    %s323 = sld [smem:[#allocation7]]
    %s324 = scalar_lea.vmem [#allocation2], %s323
    %v325 = vld [vmem:[%s324] sm:$0x1]
    %vm326 = vcmask 253952
    %327 = vst.msk [vmem:[#allocation3] sm:$0x1] %vm326, %v325
    %s328 = sld [smem:[#allocation7 + $0x1]]
    %s329 = scalar_lea.vmem [#allocation2], %s328
    %v330 = vld [vmem:[%s329] sm:$0x1]
    %331 = vst.msk [vmem:[#allocation3 + $0x1] sm:$0x1] %vm326, %v330
    %s332 = sld [smem:[#allocation7 + $0x2]]
    %s333 = scalar_lea.vmem [#allocation2], %s332
    %v334 = vld [vmem:[%s333] sm:$0x1]
    %335 = vst.msk [vmem:[#allocation3 + $0x2] sm:$0x1] %vm326, %v334
    %s336 = sld [smem:[#allocation7 + $0x3]]
    %s337 = scalar_lea.vmem [#allocation2], %s336
    %v338 = vld [vmem:[%s337] sm:$0x1]
    %339 = vst.msk [vmem:[#allocation3 + $0x3] sm:$0x1] %vm326, %v338
    %s340 = sld [smem:[#allocation7 + $0x4]]
    %s341 = scalar_lea.vmem [#allocation2], %s340
    %v342 = vld [vmem:[%s341] sm:$0x1]
    %343 = vst.msk [vmem:[#allocation3 + $0x4] sm:$0x1] %vm326, %v342
    %s344 = sld [smem:[#allocation7 + $0x5]]
    %s345 = scalar_lea.vmem [#allocation2], %s344
    %v346 = vld [vmem:[%s345] sm:$0x1]
    %347 = vst.msk [vmem:[#allocation3 + $0x5] sm:$0x1] %vm326, %v346
    %s348 = sld [smem:[#allocation7 + $0x6]]
    %s349 = scalar_lea.vmem [#allocation2], %s348
    %v350 = vld [vmem:[%s349] sm:$0x1]
    %351 = vst.msk [vmem:[#allocation3 + $0x6] sm:$0x1] %vm326, %v350
    %s352 = sld [smem:[#allocation7 + $0x7]]
    %s353 = scalar_lea.vmem [#allocation2], %s352
    %v354 = vld [vmem:[%s353] sm:$0x1]
    %355 = vst.msk [vmem:[#allocation3 + $0x7] sm:$0x1] %vm326, %v354
    %s356 = sld [smem:[#allocation7 + $0x8]]
    %s357 = scalar_lea.vmem [#allocation2], %s356
    %v358 = vld [vmem:[%s357] sm:$0x1]
    %359 = vst.msk [vmem:[#allocation3 + $0x8] sm:$0x1] %vm326, %v358
    %s360 = sld [smem:[#allocation7 + $0x9]]
    %s361 = scalar_lea.vmem [#allocation2], %s360
    %v362 = vld [vmem:[%s361] sm:$0x1]
    %363 = vst.msk [vmem:[#allocation3 + $0x9] sm:$0x1] %vm326, %v362
    %s364 = sld [smem:[#allocation7 + $0xa]]
    %s365 = scalar_lea.vmem [#allocation2], %s364
    %v366 = vld [vmem:[%s365] sm:$0x1]
    %367 = vst.msk [vmem:[#allocation3 + $0xa] sm:$0x1] %vm326, %v366
    %s368 = sld [smem:[#allocation7 + $0xb]]
    %s369 = scalar_lea.vmem [#allocation2], %s368
    %v370 = vld [vmem:[%s369] sm:$0x1]
    %371 = vst.msk [vmem:[#allocation3 + $0xb] sm:$0x1] %vm326, %v370
    %s372 = sld [smem:[#allocation7 + $0xc]]
    %s373 = scalar_lea.vmem [#allocation2], %s372
    %v374 = vld [vmem:[%s373] sm:$0x1]
    %375 = vst.msk [vmem:[#allocation3 + $0xc] sm:$0x1] %vm326, %v374
    %s376 = sld [smem:[#allocation7 + $0xd]]
    %s377 = scalar_lea.vmem [#allocation2], %s376
    %v378 = vld [vmem:[%s377] sm:$0x1]
    %379 = vst.msk [vmem:[#allocation3 + $0xd] sm:$0x1] %vm326, %v378
    %s380 = sld [smem:[#allocation7 + $0xe]]
    %s381 = scalar_lea.vmem [#allocation2], %s380
    %v382 = vld [vmem:[%s381] sm:$0x1]
    %383 = vst.msk [vmem:[#allocation3 + $0xe] sm:$0x1] %vm326, %v382
    %s384 = sld [smem:[#allocation7 + $0xf]]
    %s385 = scalar_lea.vmem [#allocation2], %s384
    %v386 = vld [vmem:[%s385] sm:$0x1]
    %387 = vst.msk [vmem:[#allocation3 + $0xf] sm:$0x1] %vm326, %v386
    %s388 = sld [smem:[#allocation7 + $0x10]]
    %s389 = scalar_lea.vmem [#allocation2], %s388
    %v390 = vld [vmem:[%s389] sm:$0x1]
    %391 = vst.msk [vmem:[#allocation3 + $0x10] sm:$0x1] %vm326, %v390
    %s392 = sld [smem:[#allocation7 + $0x11]]
    %s393 = scalar_lea.vmem [#allocation2], %s392
    %v394 = vld [vmem:[%s393] sm:$0x1]
    %395 = vst.msk [vmem:[#allocation3 + $0x11] sm:$0x1] %vm326, %v394
    %s396 = sld [smem:[#allocation7 + $0x12]]
    %s397 = scalar_lea.vmem [#allocation2], %s396
    %v398 = vld [vmem:[%s397] sm:$0x1]
    %399 = vst.msk [vmem:[#allocation3 + $0x12] sm:$0x1] %vm326, %v398
    %s400 = sld [smem:[#allocation7 + $0x13]]
    %s401 = scalar_lea.vmem [#allocation2], %s400
    %v402 = vld [vmem:[%s401] sm:$0x1]
    %403 = vst.msk [vmem:[#allocation3 + $0x13] sm:$0x1] %vm326, %v402
    %s404 = sld [smem:[#allocation7 + $0x14]]
    %s405 = scalar_lea.vmem [#allocation2], %s404
    %v406 = vld [vmem:[%s405] sm:$0x1]
    %407 = vst.msk [vmem:[#allocation3 + $0x14] sm:$0x1] %vm326, %v406
    %s408 = sld [smem:[#allocation7 + $0x15]]
    %s409 = scalar_lea.vmem [#allocation2], %s408
    %v410 = vld [vmem:[%s409] sm:$0x1]
    %411 = vst.msk [vmem:[#allocation3 + $0x15] sm:$0x1] %vm326, %v410
    %s412 = sld [smem:[#allocation7 + $0x16]]
    %s413 = scalar_lea.vmem [#allocation2], %s412
    %v414 = vld [vmem:[%s413] sm:$0x1]
    %415 = vst.msk [vmem:[#allocation3 + $0x16] sm:$0x1] %vm326, %v414
    %s416 = sld [smem:[#allocation7 + $0x17]]
    %s417 = scalar_lea.vmem [#allocation2], %s416
    %v418 = vld [vmem:[%s417] sm:$0x1]
    %419 = vst.msk [vmem:[#allocation3 + $0x17] sm:$0x1] %vm326, %v418
    %s420 = sld [smem:[#allocation7 + $0x18]]
    %s421 = scalar_lea.vmem [#allocation2], %s420
    %v422 = vld [vmem:[%s421] sm:$0x1]
    %423 = vst.msk [vmem:[#allocation3 + $0x18] sm:$0x1] %vm326, %v422
    %s424 = sld [smem:[#allocation7 + $0x19]]
    %s425 = scalar_lea.vmem [#allocation2], %s424
    %v426 = vld [vmem:[%s425] sm:$0x1]
    %427 = vst.msk [vmem:[#allocation3 + $0x19] sm:$0x1] %vm326, %v426
    %s428 = sld [smem:[#allocation7 + $0x1a]]
    %s429 = scalar_lea.vmem [#allocation2], %s428
    %v430 = vld [vmem:[%s429] sm:$0x1]
    %431 = vst.msk [vmem:[#allocation3 + $0x1a] sm:$0x1] %vm326, %v430
    %s432 = sld [smem:[#allocation7 + $0x1b]]
    %s433 = scalar_lea.vmem [#allocation2], %s432
    %v434 = vld [vmem:[%s433] sm:$0x1]
    %435 = vst.msk [vmem:[#allocation3 + $0x1b] sm:$0x1] %vm326, %v434
    %s436 = sld [smem:[#allocation7 + $0x1c]]
    %s437 = scalar_lea.vmem [#allocation2], %s436
    %v438 = vld [vmem:[%s437] sm:$0x1]
    %439 = vst.msk [vmem:[#allocation3 + $0x1c] sm:$0x1] %vm326, %v438
    %s440 = sld [smem:[#allocation7 + $0x1d]]
    %s441 = scalar_lea.vmem [#allocation2], %s440
    %v442 = vld [vmem:[%s441] sm:$0x1]
    %443 = vst.msk [vmem:[#allocation3 + $0x1d] sm:$0x1] %vm326, %v442
    %s444 = sld [smem:[#allocation7 + $0x1e]]
    %s445 = scalar_lea.vmem [#allocation2], %s444
    %v446 = vld [vmem:[%s445] sm:$0x1]
    %447 = vst.msk [vmem:[#allocation3 + $0x1e] sm:$0x1] %vm326, %v446
    %s448 = sld [smem:[#allocation7 + $0x1f]]
    %s449 = scalar_lea.vmem [#allocation2], %s448
    %v450 = vld [vmem:[%s449] sm:$0x1]
    %451 = vst.msk [vmem:[#allocation3 + $0x1f] sm:$0x1] %vm326, %v450
    %v452 = vld [vmem:[#allocation3] sm:$0xff]
    %v453 = vld [vmem:[#allocation3 + $0x8] sm:$0xff]
    %v454 = vld [vmem:[#allocation3 + $0x10] sm:$0xff]
    %v455 = vld [vmem:[#allocation3 + $0x18] sm:$0xff]
    %v456 = vadd.f32 %v452, %v305
    %v457 = vadd.f32 %v453, %v310
    %v458 = vadd.f32 %v454, %v315
    %v459 = vadd.f32 %v455, %v320
    %v460 = vld [vmem:[%s7] sm:$0xff]
    %v461 = vld [vmem:[%s7 + $0x8] sm:$0xff]
    %v462 = vld [vmem:[%s7 + $0x10] sm:$0xff]
    %v463 = vld [vmem:[%s7 + $0x18] sm:$0xff]
    %v464 = vld [vmem:[%s8] sm:$0x1]
    %v466 = vlaneseq
    %v467 = vshrl.u32 %v466, 7
    %v468 = vsub.s32 0, %v467
    %v469 = vrot.slane %v464, %v468
    %v472 = vsel %vm112, %v456, 0
    %v475 = vsel %vm112, %v457, 0
    %v478 = vsel %vm112, %v458, 0
    %v481 = vsel %vm112, %v459, 0
    %483 = vmatprep.subr.mxu0 0.0
    %484 = vmatpush1.msra.mxu0 %v460
    %485 = vmatprep.subr.mxu0 0.0
    %486 = vmatpush1.msra.mxu0 %v461
    %487 = vmatprep.subr.mxu0 0.0
    %488 = vmatpush1.msra.mxu0 %v462
    %489 = vmatprep.subr.mxu0 0.0
    %490 = vmatpush1.msra.mxu0 %v463
    %491 = vmatprep.subr.mxu0 0.0
    %492 = vmatpush1.msra.mxu0 0.0
    %493 = vmatprep.subr.mxu0 0.0
    %494 = vmatpush1.msra.mxu0 0.0
    %495 = vmatprep.subr.mxu0 0.0
    %496 = vmatpush1.msra.mxu0 0.0
    %497 = vmatprep.subr.mxu0 0.0
    %498 = vmatpush1.msra.mxu0 0.0
    %499 = vmatprep.subr.mxu0 0.0
    %500 = vmatpush1.msra.mxu0 0.0
    %501 = vmatprep.subr.mxu0 0.0
    %502 = vmatpush1.msra.mxu0 0.0
    %503 = vmatprep.subr.mxu0 0.0
    %504 = vmatpush1.msra.mxu0 0.0
    %505 = vmatprep.subr.mxu0 0.0
    %506 = vmatpush1.msra.mxu0 0.0
    %507 = vmatprep.subr.mxu0 0.0
    %508 = vmatpush1.msra.mxu0 0.0
    %509 = vmatprep.subr.mxu0 0.0
    %510 = vmatpush1.msra.mxu0 0.0
    %511 = vmatprep.subr.mxu0 0.0
    %512 = vmatpush1.msra.mxu0 0.0
    %513 = vmatprep.subr.mxu0 0.0
    %514 = vmatpush1.msra.mxu0 0.0
    %515 = vmatprep.subr.mxu0 0.0
    %516 = vmatpush1.msra.mxu0 0.0
    %517 = vmatprep.subr.mxu0 0.0
    %518 = vmatpush1.msra.mxu0 0.0
    %519 = vmatprep.subr.mxu0 0.0
    %520 = vmatpush1.msra.mxu0 0.0
    %521 = vmatprep.subr.mxu0 0.0
    %522 = vmatpush1.msra.mxu0 0.0
    %523 = vmatprep.subr.mxu0 0.0
    %524 = vmatpush1.msra.mxu0 0.0
    %525 = vmatprep.subr.mxu0 0.0
    %526 = vmatpush1.msra.mxu0 0.0
    %527 = vmatprep.subr.mxu0 0.0
    %528 = vmatpush1.msra.mxu0 0.0
    %529 = vmatprep.subr.mxu0 0.0
    %530 = vmatpush1.msra.mxu0 0.0
    %531 = vmatprep.subr.mxu0 0.0
    %532 = vmatpush1.msra.mxu0 0.0
    %533 = vmatprep.subr.mxu0 0.0
    %534 = vmatpush1.msra.mxu0 0.0
    %535 = vmatprep.subr.mxu0 0.0
    %536 = vmatpush1.msra.mxu0 0.0
    %537 = vmatprep.subr.mxu0 0.0
    %538 = vmatpush1.msra.mxu0 0.0
    %539 = vmatprep.subr.mxu0 0.0
    %540 = vmatpush1.msra.mxu0 0.0
    %541 = vmatprep.subr.mxu0 0.0
    %542 = vmatpush1.msra.mxu0 0.0
    %543 = vmatprep.subr.mxu0 0.0
    %544 = vmatpush1.msra.mxu0 0.0
    %545 = vmatprep.subr.mxu0 0.0
    %546 = vmatpush1.msra.mxu0 0.0
    %547 = vmatprep.mubr.f32.mxu0 0.0
    %548 = vmatmul.mubr.f32.gmra.mrb[0].mxu0 %v472
    %v549 = vpop.f32.mrb[0].mxu0
    %v550 = vadd.f32 %v469, %v549
    %v551 = vpop.f32.mrb[0].mxu0
    %552 = vmatprep.mubr.f32.mxu0 0.0
    %553 = vmatmul.mubr.f32.gmra.mrb[0].mxu0 %v475
    %v554 = vpop.f32.mrb[0].mxu0
    %v555 = vadd.f32 %v469, %v554
    %v556 = vpop.f32.mrb[0].mxu0
    %557 = vmatprep.mubr.f32.mxu0 0.0
    %558 = vmatmul.mubr.f32.gmra.mrb[0].mxu0 %v478
    %v559 = vpop.f32.mrb[0].mxu0
    %v560 = vadd.f32 %v469, %v559
    %v561 = vpop.f32.mrb[0].mxu0
    %562 = vmatprep.mubr.f32.mxu0 0.0
    %563 = vmatmul.mubr.f32.gmra.mrb[0].mxu0 %v481
    %v564 = vpop.f32.mrb[0].mxu0
    %v565 = vadd.f32 %v469, %v564
    %v566 = vpop.f32.mrb[0].mxu0
    %567 = vdwg.mxu0
    %v568 = vmax.f32 %v550, 0.0
    %v569 = vmax.f32 %v555, 0.0
    %v570 = vmax.f32 %v560, 0.0
    %v571 = vmax.f32 %v565, 0.0
    %572 = vst.msk [vmem:[#allocation4] sm:$0xff] %vm112, %v568
    %573 = vst.msk [vmem:[#allocation4 + $0x8] sm:$0xff] %vm112, %v569
    %574 = vst.msk [vmem:[#allocation4 + $0x10] sm:$0xff] %vm112, %v570
    %575 = vst.msk [vmem:[#allocation4 + $0x18] sm:$0xff] %vm112, %v571
    %576 = vst.msk [vmem:[#allocation5] sm:$0xff] %vm112, 0.0
    %577 = vst.msk [vmem:[#allocation5 + $0x8] sm:$0xff] %vm112, 0.0
    %s578 = sld [smem:[#allocation8]]
    %s579 = scalar_lea.vmem [#allocation5], %s578
    %v580 = vld [vmem:[%s579] sm:$0x1]
    %v581 = vld [vmem:[#allocation4] sm:$0x1]
    %v582 = vadd.f32 %v580, %v581
    %583 = vst.msk [vmem:[%s579] sm:$0x1] %vm326, %v582
    %s584 = sld [smem:[#allocation8 + $0x1]]
    %s585 = scalar_lea.vmem [#allocation5], %s584
    %v586 = vld [vmem:[%s585] sm:$0x1]
    %v587 = vld [vmem:[#allocation4 + $0x1] sm:$0x1]
    %v588 = vadd.f32 %v586, %v587
    %589 = vst.msk [vmem:[%s585] sm:$0x1] %vm326, %v588
    %s590 = sld [smem:[#allocation8 + $0x2]]
    %s591 = scalar_lea.vmem [#allocation5], %s590
    %v592 = vld [vmem:[%s591] sm:$0x1]
    %v593 = vld [vmem:[#allocation4 + $0x2] sm:$0x1]
    %v594 = vadd.f32 %v592, %v593
    %595 = vst.msk [vmem:[%s591] sm:$0x1] %vm326, %v594
    %s596 = sld [smem:[#allocation8 + $0x3]]
    %s597 = scalar_lea.vmem [#allocation5], %s596
    %v598 = vld [vmem:[%s597] sm:$0x1]
    %v599 = vld [vmem:[#allocation4 + $0x3] sm:$0x1]
    %v600 = vadd.f32 %v598, %v599
    %601 = vst.msk [vmem:[%s597] sm:$0x1] %vm326, %v600
    %s602 = sld [smem:[#allocation8 + $0x4]]
    %s603 = scalar_lea.vmem [#allocation5], %s602
    %v604 = vld [vmem:[%s603] sm:$0x1]
    %v605 = vld [vmem:[#allocation4 + $0x4] sm:$0x1]
    %v606 = vadd.f32 %v604, %v605
    %607 = vst.msk [vmem:[%s603] sm:$0x1] %vm326, %v606
    %s608 = sld [smem:[#allocation8 + $0x5]]
    %s609 = scalar_lea.vmem [#allocation5], %s608
    %v610 = vld [vmem:[%s609] sm:$0x1]
    %v611 = vld [vmem:[#allocation4 + $0x5] sm:$0x1]
    %v612 = vadd.f32 %v610, %v611
    %613 = vst.msk [vmem:[%s609] sm:$0x1] %vm326, %v612
    %s614 = sld [smem:[#allocation8 + $0x6]]
    %s615 = scalar_lea.vmem [#allocation5], %s614
    %v616 = vld [vmem:[%s615] sm:$0x1]
    %v617 = vld [vmem:[#allocation4 + $0x6] sm:$0x1]
    %v618 = vadd.f32 %v616, %v617
    %619 = vst.msk [vmem:[%s615] sm:$0x1] %vm326, %v618
    %s620 = sld [smem:[#allocation8 + $0x7]]
    %s621 = scalar_lea.vmem [#allocation5], %s620
    %v622 = vld [vmem:[%s621] sm:$0x1]
    %v623 = vld [vmem:[#allocation4 + $0x7] sm:$0x1]
    %v624 = vadd.f32 %v622, %v623
    %625 = vst.msk [vmem:[%s621] sm:$0x1] %vm326, %v624
    %s626 = sld [smem:[#allocation8 + $0x8]]
    %s627 = scalar_lea.vmem [#allocation5], %s626
    %v628 = vld [vmem:[%s627] sm:$0x1]
    %v629 = vld [vmem:[#allocation4 + $0x8] sm:$0x1]
    %v630 = vadd.f32 %v628, %v629
    %631 = vst.msk [vmem:[%s627] sm:$0x1] %vm326, %v630
    %s632 = sld [smem:[#allocation8 + $0x9]]
    %s633 = scalar_lea.vmem [#allocation5], %s632
    %v634 = vld [vmem:[%s633] sm:$0x1]
    %v635 = vld [vmem:[#allocation4 + $0x9] sm:$0x1]
    %v636 = vadd.f32 %v634, %v635
    %637 = vst.msk [vmem:[%s633] sm:$0x1] %vm326, %v636
    %s638 = sld [smem:[#allocation8 + $0xa]]
    %s639 = scalar_lea.vmem [#allocation5], %s638
    %v640 = vld [vmem:[%s639] sm:$0x1]
    %v641 = vld [vmem:[#allocation4 + $0xa] sm:$0x1]
    %v642 = vadd.f32 %v640, %v641
    %643 = vst.msk [vmem:[%s639] sm:$0x1] %vm326, %v642
    %s644 = sld [smem:[#allocation8 + $0xb]]
    %s645 = scalar_lea.vmem [#allocation5], %s644
    %v646 = vld [vmem:[%s645] sm:$0x1]
    %v647 = vld [vmem:[#allocation4 + $0xb] sm:$0x1]
    %v648 = vadd.f32 %v646, %v647
    %649 = vst.msk [vmem:[%s645] sm:$0x1] %vm326, %v648
    %s650 = sld [smem:[#allocation8 + $0xc]]
    %s651 = scalar_lea.vmem [#allocation5], %s650
    %v652 = vld [vmem:[%s651] sm:$0x1]
    %v653 = vld [vmem:[#allocation4 + $0xc] sm:$0x1]
    %v654 = vadd.f32 %v652, %v653
    %655 = vst.msk [vmem:[%s651] sm:$0x1] %vm326, %v654
    %s656 = sld [smem:[#allocation8 + $0xd]]
    %s657 = scalar_lea.vmem [#allocation5], %s656
    %v658 = vld [vmem:[%s657] sm:$0x1]
    %v659 = vld [vmem:[#allocation4 + $0xd] sm:$0x1]
    %v660 = vadd.f32 %v658, %v659
    %661 = vst.msk [vmem:[%s657] sm:$0x1] %vm326, %v660
    %s662 = sld [smem:[#allocation8 + $0xe]]
    %s663 = scalar_lea.vmem [#allocation5], %s662
    %v664 = vld [vmem:[%s663] sm:$0x1]
    %v665 = vld [vmem:[#allocation4 + $0xe] sm:$0x1]
    %v666 = vadd.f32 %v664, %v665
    %667 = vst.msk [vmem:[%s663] sm:$0x1] %vm326, %v666
    %s668 = sld [smem:[#allocation8 + $0xf]]
    %s669 = scalar_lea.vmem [#allocation5], %s668
    %v670 = vld [vmem:[%s669] sm:$0x1]
    %v671 = vld [vmem:[#allocation4 + $0xf] sm:$0x1]
    %v672 = vadd.f32 %v670, %v671
    %673 = vst.msk [vmem:[%s669] sm:$0x1] %vm326, %v672
    %s674 = sld [smem:[#allocation8 + $0x10]]
    %s675 = scalar_lea.vmem [#allocation5], %s674
    %v676 = vld [vmem:[%s675] sm:$0x1]
    %v677 = vld [vmem:[#allocation4 + $0x10] sm:$0x1]
    %v678 = vadd.f32 %v676, %v677
    %679 = vst.msk [vmem:[%s675] sm:$0x1] %vm326, %v678
    %s680 = sld [smem:[#allocation8 + $0x11]]
    %s681 = scalar_lea.vmem [#allocation5], %s680
    %v682 = vld [vmem:[%s681] sm:$0x1]
    %v683 = vld [vmem:[#allocation4 + $0x11] sm:$0x1]
    %v684 = vadd.f32 %v682, %v683
    %685 = vst.msk [vmem:[%s681] sm:$0x1] %vm326, %v684
    %s686 = sld [smem:[#allocation8 + $0x12]]
    %s687 = scalar_lea.vmem [#allocation5], %s686
    %v688 = vld [vmem:[%s687] sm:$0x1]
    %v689 = vld [vmem:[#allocation4 + $0x12] sm:$0x1]
    %v690 = vadd.f32 %v688, %v689
    %691 = vst.msk [vmem:[%s687] sm:$0x1] %vm326, %v690
    %s692 = sld [smem:[#allocation8 + $0x13]]
    %s693 = scalar_lea.vmem [#allocation5], %s692
    %v694 = vld [vmem:[%s693] sm:$0x1]
    %v695 = vld [vmem:[#allocation4 + $0x13] sm:$0x1]
    %v696 = vadd.f32 %v694, %v695
    %697 = vst.msk [vmem:[%s693] sm:$0x1] %vm326, %v696
    %s698 = sld [smem:[#allocation8 + $0x14]]
    %s699 = scalar_lea.vmem [#allocation5], %s698
    %v700 = vld [vmem:[%s699] sm:$0x1]
    %v701 = vld [vmem:[#allocation4 + $0x14] sm:$0x1]
    %v702 = vadd.f32 %v700, %v701
    %703 = vst.msk [vmem:[%s699] sm:$0x1] %vm326, %v702
    %s704 = sld [smem:[#allocation8 + $0x15]]
    %s705 = scalar_lea.vmem [#allocation5], %s704
    %v706 = vld [vmem:[%s705] sm:$0x1]
    %v707 = vld [vmem:[#allocation4 + $0x15] sm:$0x1]
    %v708 = vadd.f32 %v706, %v707
    %709 = vst.msk [vmem:[%s705] sm:$0x1] %vm326, %v708
    %s710 = sld [smem:[#allocation8 + $0x16]]
    %s711 = scalar_lea.vmem [#allocation5], %s710
    %v712 = vld [vmem:[%s711] sm:$0x1]
    %v713 = vld [vmem:[#allocation4 + $0x16] sm:$0x1]
    %v714 = vadd.f32 %v712, %v713
    %715 = vst.msk [vmem:[%s711] sm:$0x1] %vm326, %v714
    %s716 = sld [smem:[#allocation8 + $0x17]]
    %s717 = scalar_lea.vmem [#allocation5], %s716
    %v718 = vld [vmem:[%s717] sm:$0x1]
    %v719 = vld [vmem:[#allocation4 + $0x17] sm:$0x1]
    %v720 = vadd.f32 %v718, %v719
    %721 = vst.msk [vmem:[%s717] sm:$0x1] %vm326, %v720
    %s722 = sld [smem:[#allocation8 + $0x18]]
    %s723 = scalar_lea.vmem [#allocation5], %s722
    %v724 = vld [vmem:[%s723] sm:$0x1]
    %v725 = vld [vmem:[#allocation4 + $0x18] sm:$0x1]
    %v726 = vadd.f32 %v724, %v725
    %727 = vst.msk [vmem:[%s723] sm:$0x1] %vm326, %v726
    %s728 = sld [smem:[#allocation8 + $0x19]]
    %s729 = scalar_lea.vmem [#allocation5], %s728
    %v730 = vld [vmem:[%s729] sm:$0x1]
    %v731 = vld [vmem:[#allocation4 + $0x19] sm:$0x1]
    %v732 = vadd.f32 %v730, %v731
    %733 = vst.msk [vmem:[%s729] sm:$0x1] %vm326, %v732
    %s734 = sld [smem:[#allocation8 + $0x1a]]
    %s735 = scalar_lea.vmem [#allocation5], %s734
    %v736 = vld [vmem:[%s735] sm:$0x1]
    %v737 = vld [vmem:[#allocation4 + $0x1a] sm:$0x1]
    %v738 = vadd.f32 %v736, %v737
    %739 = vst.msk [vmem:[%s735] sm:$0x1] %vm326, %v738
    %s740 = sld [smem:[#allocation8 + $0x1b]]
    %s741 = scalar_lea.vmem [#allocation5], %s740
    %v742 = vld [vmem:[%s741] sm:$0x1]
    %v743 = vld [vmem:[#allocation4 + $0x1b] sm:$0x1]
    %v744 = vadd.f32 %v742, %v743
    %745 = vst.msk [vmem:[%s741] sm:$0x1] %vm326, %v744
    %s746 = sld [smem:[#allocation8 + $0x1c]]
    %s747 = scalar_lea.vmem [#allocation5], %s746
    %v748 = vld [vmem:[%s747] sm:$0x1]
    %v749 = vld [vmem:[#allocation4 + $0x1c] sm:$0x1]
    %v750 = vadd.f32 %v748, %v749
    %751 = vst.msk [vmem:[%s747] sm:$0x1] %vm326, %v750
    %s752 = sld [smem:[#allocation8 + $0x1d]]
    %s753 = scalar_lea.vmem [#allocation5], %s752
    %v754 = vld [vmem:[%s753] sm:$0x1]
    %v755 = vld [vmem:[#allocation4 + $0x1d] sm:$0x1]
    %v756 = vadd.f32 %v754, %v755
    %757 = vst.msk [vmem:[%s753] sm:$0x1] %vm326, %v756
    %s758 = sld [smem:[#allocation8 + $0x1e]]
    %s759 = scalar_lea.vmem [#allocation5], %s758
    %v760 = vld [vmem:[%s759] sm:$0x1]
    %v761 = vld [vmem:[#allocation4 + $0x1e] sm:$0x1]
    %v762 = vadd.f32 %v760, %v761
    %763 = vst.msk [vmem:[%s759] sm:$0x1] %vm326, %v762
    %s764 = sld [smem:[#allocation8 + $0x1f]]
    %s765 = scalar_lea.vmem [#allocation5], %s764
    %v766 = vld [vmem:[%s765] sm:$0x1]
    %v767 = vld [vmem:[#allocation4 + $0x1f] sm:$0x1]
    %v768 = vadd.f32 %v766, %v767
    %769 = vst.msk [vmem:[%s765] sm:$0x1] %vm326, %v768
    %v770 = vld [vmem:[#allocation2] sm:$0xff]
    %v771 = vld [vmem:[#allocation2 + $0x8] sm:$0xff]
    %v772 = vld [vmem:[%s9] sm:$0xff]
    %v773 = vld [vmem:[%s9 + $0x8] sm:$0xff]
    %v774 = vld [vmem:[%s9 + $0x10] sm:$0xff]
    %v775 = vld [vmem:[%s9 + $0x18] sm:$0xff]
    %v776 = vld [vmem:[#allocation5] sm:$0xff]
    %v777 = vld [vmem:[#allocation5 + $0x8] sm:$0xff]
    %v779 = vsel %vm112, %v770, 0
    %v782 = vsel %vm112, %v771, 0
    %784 = vmatprep.subr.mxu0 0.0
    %785 = vmatpush1.msra.mxu0 %v772
    %786 = vmatprep.subr.mxu0 0.0
    %787 = vmatpush1.msra.mxu0 %v773
    %788 = vmatprep.subr.mxu0 0.0
    %789 = vmatpush1.msra.mxu0 %v774
    %790 = vmatprep.subr.mxu0 0.0
    %791 = vmatpush1.msra.mxu0 %v775
    %792 = vmatprep.subr.mxu0 0.0
    %793 = vmatpush1.msra.mxu0 0.0
    %794 = vmatprep.subr.mxu0 0.0
    %795 = vmatpush1.msra.mxu0 0.0
    %796 = vmatprep.subr.mxu0 0.0
    %797 = vmatpush1.msra.mxu0 0.0
    %798 = vmatprep.subr.mxu0 0.0
    %799 = vmatpush1.msra.mxu0 0.0
    %800 = vmatprep.subr.mxu0 0.0
    %801 = vmatpush1.msra.mxu0 0.0
    %802 = vmatprep.subr.mxu0 0.0
    %803 = vmatpush1.msra.mxu0 0.0
    %804 = vmatprep.subr.mxu0 0.0
    %805 = vmatpush1.msra.mxu0 0.0
    %806 = vmatprep.subr.mxu0 0.0
    %807 = vmatpush1.msra.mxu0 0.0
    %808 = vmatprep.subr.mxu0 0.0
    %809 = vmatpush1.msra.mxu0 0.0
    %810 = vmatprep.subr.mxu0 0.0
    %811 = vmatpush1.msra.mxu0 0.0
    %812 = vmatprep.subr.mxu0 0.0
    %813 = vmatpush1.msra.mxu0 0.0
    %814 = vmatprep.subr.mxu0 0.0
    %815 = vmatpush1.msra.mxu0 0.0
    %816 = vmatprep.subr.mxu0 0.0
    %817 = vmatpush1.msra.mxu0 0.0
    %818 = vmatprep.subr.mxu0 0.0
    %819 = vmatpush1.msra.mxu0 0.0
    %820 = vmatprep.subr.mxu0 0.0
    %821 = vmatpush1.msra.mxu0 0.0
    %822 = vmatprep.subr.mxu0 0.0
    %823 = vmatpush1.msra.mxu0 0.0
    %824 = vmatprep.subr.mxu0 0.0
    %825 = vmatpush1.msra.mxu0 0.0
    %826 = vmatprep.subr.mxu0 0.0
    %827 = vmatpush1.msra.mxu0 0.0
    %828 = vmatprep.subr.mxu0 0.0
    %829 = vmatpush1.msra.mxu0 0.0
    %830 = vmatprep.subr.mxu0 0.0
    %831 = vmatpush1.msra.mxu0 0.0
    %832 = vmatprep.subr.mxu0 0.0
    %833 = vmatpush1.msra.mxu0 0.0
    %834 = vmatprep.subr.mxu0 0.0
    %835 = vmatpush1.msra.mxu0 0.0
    %836 = vmatprep.subr.mxu0 0.0
    %837 = vmatpush1.msra.mxu0 0.0
    %838 = vmatprep.subr.mxu0 0.0
    %839 = vmatpush1.msra.mxu0 0.0
    %840 = vmatprep.subr.mxu0 0.0
    %841 = vmatpush1.msra.mxu0 0.0
    %842 = vmatprep.subr.mxu0 0.0
    %843 = vmatpush1.msra.mxu0 0.0
    %844 = vmatprep.subr.mxu0 0.0
    %845 = vmatpush1.msra.mxu0 0.0
    %846 = vmatprep.subr.mxu0 0.0
    %847 = vmatpush1.msra.mxu0 0.0
    %848 = vmatprep.mubr.f32.mxu0 0.0
    %849 = vmatmul.mubr.f32.gmra.mrb[0].mxu0 %v779
    %v850 = vpop.f32.mrb[0].mxu0
    %v851 = vadd.f32 %v776, %v850
    %v852 = vpop.f32.mrb[0].mxu0
    %853 = vmatprep.mubr.f32.mxu0 0.0
    %854 = vmatmul.mubr.f32.gmra.mrb[0].mxu0 %v782
    %v855 = vpop.f32.mrb[0].mxu0
    %v856 = vadd.f32 %v777, %v855
    %v857 = vpop.f32.mrb[0].mxu0
    %858 = vdwg.mxu0
    %v859 = vld [vmem:[%s10] sm:$0x1]
    %v861 = vlaneseq
    %v862 = vshrl.u32 %v861, 7
    %v863 = vsub.s32 0, %v862
    %v864 = vrot.slane %v859, %v863
    %v866 = vadd.f32 %v851, %v864
    %v867 = vadd.f32 %v856, %v864
    %v868 = vmax.f32 %v866, 0.0
    %v869 = vmax.f32 %v867, 0.0
    %870 = vst.msk [vmem:[#allocation9] sm:$0xff] %vm112, %v868
    %871 = vst.msk [vmem:[#allocation9 + $0x8] sm:$0xff] %vm112, %v869
    %v872 = vlaneseq
    %v873 = vshrl.u32 %v872, 7
    %v874 = vld [vmem:[%s4] sm:$0x1]
    %v875 = vlaneseq
    %v876 = vshrl.u32 %v875, 7
    %v877 = vsub.s32 0, %v876
    %v878 = vrot.slane %v874, %v877
    %vm879 = vcmp.eq.s32.totalorder %v873, %v878
    %v880 = vsel %vm879, 1, 0
    %v881 = vcvt.s32.f32 %v880
    %vm882 = vcmask 130048
    %v884 = vsel %vm882, %v881, 0
    %886 = vmatprep.subr.mxu0 0.0
    %887 = vmatpush1.msra.mxu0 %v868
    %888 = vmatprep.subr.mxu0 0.0
    %889 = vmatpush1.msra.mxu0 %v869
    %890 = vmatprep.subr.mxu0 0.0
    %891 = vmatpush1.msra.mxu0 0.0
    %892 = vmatprep.subr.mxu0 0.0
    %893 = vmatpush1.msra.mxu0 0.0
    %894 = vmatprep.subr.mxu0 0.0
    %895 = vmatpush1.msra.mxu0 0.0
    %896 = vmatprep.subr.mxu0 0.0
    %897 = vmatpush1.msra.mxu0 0.0
    %898 = vmatprep.subr.mxu0 0.0
    %899 = vmatpush1.msra.mxu0 0.0
    %900 = vmatprep.subr.mxu0 0.0
    %901 = vmatpush1.msra.mxu0 0.0
    %902 = vmatprep.subr.mxu0 0.0
    %903 = vmatpush1.msra.mxu0 0.0
    %904 = vmatprep.subr.mxu0 0.0
    %905 = vmatpush1.msra.mxu0 0.0
    %906 = vmatprep.subr.mxu0 0.0
    %907 = vmatpush1.msra.mxu0 0.0
    %908 = vmatprep.subr.mxu0 0.0
    %909 = vmatpush1.msra.mxu0 0.0
    %910 = vmatprep.subr.mxu0 0.0
    %911 = vmatpush1.msra.mxu0 0.0
    %912 = vmatprep.subr.mxu0 0.0
    %913 = vmatpush1.msra.mxu0 0.0
    %914 = vmatprep.subr.mxu0 0.0
    %915 = vmatpush1.msra.mxu0 0.0
    %916 = vmatprep.subr.mxu0 0.0
    %917 = vmatpush1.msra.mxu0 0.0
    %918 = vmatprep.subr.mxu0 0.0
    %919 = vmatpush1.msra.mxu0 0.0
    %920 = vmatprep.subr.mxu0 0.0
    %921 = vmatpush1.msra.mxu0 0.0
    %922 = vmatprep.subr.mxu0 0.0
    %923 = vmatpush1.msra.mxu0 0.0
    %924 = vmatprep.subr.mxu0 0.0
    %925 = vmatpush1.msra.mxu0 0.0
    %926 = vmatprep.subr.mxu0 0.0
    %927 = vmatpush1.msra.mxu0 0.0
    %928 = vmatprep.subr.mxu0 0.0
    %929 = vmatpush1.msra.mxu0 0.0
    %930 = vmatprep.subr.mxu0 0.0
    %931 = vmatpush1.msra.mxu0 0.0
    %932 = vmatprep.subr.mxu0 0.0
    %933 = vmatpush1.msra.mxu0 0.0
    %934 = vmatprep.subr.mxu0 0.0
    %935 = vmatpush1.msra.mxu0 0.0
    %936 = vmatprep.subr.mxu0 0.0
    %937 = vmatpush1.msra.mxu0 0.0
    %938 = vmatprep.subr.mxu0 0.0
    %939 = vmatpush1.msra.mxu0 0.0
    %940 = vmatprep.subr.mxu0 0.0
    %941 = vmatpush1.msra.mxu0 0.0
    %942 = vmatprep.subr.mxu0 0.0
    %943 = vmatpush1.msra.mxu0 0.0
    %944 = vmatprep.subr.mxu0 0.0
    %945 = vmatpush1.msra.mxu0 0.0
    %946 = vmatprep.subr.mxu0 0.0
    %947 = vmatpush1.msra.mxu0 0.0
    %948 = vmatprep.subr.mxu0 0.0
    %949 = vmatpush1.msra.mxu0 0.0
    %950 = vmatprep.mubr.f32.mxu0 0.0
    %951 = vmatmul.mubr.f32.gmra.mrb[0].mxu0 %v884
    %v952 = vpop.f32.mrb[0].mxu0
    %v953 = vadd.f32 0.0, %v952
    %v954 = vpop.f32.mrb[0].mxu0
    %955 = vdwg.mxu0
    %vm956 = vcmask 123904
    %v957 = vsel %vm956, %v881, 0.0
    %958 = vadd.xlane.f32.xlu0 %v957
    %v959 = vpop.xlane.xlu0 %958
    %v960 = vmax.f32 %v959, 1.0
    %v961 = vrcp.pop %v960
    %v962 = vmul.f32 %v953, %v961
    %vm963 = vcmask 254976
    %964 = vst.msk [vmem:[#allocation11] sm:$0x3] %vm963, %v962
    // Predicated region
    $region38: #{encoder_forward.1} parent=1 // pred_check
      _
    $region39: #{encoder_forward.1} parent=1 // pred_check_branch
      %966 = sbr.rel (0) target = $region41
    $region40: #{encoder_forward.1} parent=1 // pred_region
      %s968 = ssub.s32 256, 256
      %969 = vsyncadd [#allocation10], %s968
      %s970 = sshll.u32 [#allocation9], 4
      %s971 = int_to_ptr.vmem [resolvable:$true] %s970
      %976 = dma.vmem_to_hbm [thread:$0]  %s971, 256, %s11, [#allocation10], 128, 128, 8
    $region41: #{encoder_forward.1} parent=1 // pred_fallthru
      _
    // Predicated region
    $region42: #{encoder_forward.1} parent=1 // pred_check
      _
    $region43: #{encoder_forward.1} parent=1 // pred_check_branch
      %978 = sbr.rel (0) target = $region45
    $region44: #{encoder_forward.1} parent=1 // pred_region
      %s980 = ssub.s32 32, 32
      %981 = vsyncadd [#allocation12], %s980
      %s983 = sshll.u32 [#allocation11], 4
      %s984 = int_to_ptr.vmem [resolvable:$true] %s983
      %986 = dma.vmem_to_hbm [thread:$0]  %s984, 32, %s12, [#allocation12]
    $region45: #{encoder_forward.1} parent=1 // pred_fallthru
      _
    // Predicated region
    $region46: #{encoder_forward.1} parent=1 // pred_check
      _
    $region47: #{encoder_forward.1} parent=1 // pred_check_branch
      %988 = sbr.rel (0) target = $region49
    $region48: #{encoder_forward.1} parent=1 // pred_region
      %989 = dma.done [#allocation10], 256
    $region49: #{encoder_forward.1} parent=1 // pred_fallthru
      _
    // Predicated region
    $region50: #{encoder_forward.1} parent=1 // pred_check
      _
    $region51: #{encoder_forward.1} parent=1 // pred_check_branch
      %991 = sbr.rel (0) target = $region53
    $region52: #{encoder_forward.1} parent=1 // pred_region
      %992 = dma.done [#allocation12], 32
    $region53: #{encoder_forward.1} parent=1 // pred_fallthru
      _
    %993 = vsyncpa [#allocation10], 1
    %994 = vsyncpa [#allocation12], 1

</llo_original>
